<compile_context>
chip_gen: v5e
topology: v5e:2x2
jax: 0.10.0
libtpu: 0.0.40
codegen_flags: <defaults>
</compile_context>

<pallas_src>
import functools

import jax
import jax.numpy as jnp
import numpy as np
from jax.experimental import pallas as pl
from jax.experimental.pallas import tpu as pltpu


def _round_up(x, m):
    return (x + m - 1) // m * m


def _rnn_kernel(x_ref, h0_ref, c0_ref, wih_ref, whh_ref, b_ref,
                w1a_ref, w1b_ref, b1_ref, w2_ref, b2_ref,
                pred_ref, h_sc, c_sc, hfirst_sc, xp_sc,
                *, hidden, t_blk, b_tile, seq_len, needs_mask):
    tb = pl.program_id(1)                       # time-block index ("arbitrary" axis)
    last_tb = pl.num_programs(1) - 1
    hp = h_sc.shape[1]                          # round_up(hidden, 128): state / K padding
    gp = b_ref.shape[1]                         # round_up(4*hidden, 128): packed gate axis

    # Initial hidden state only at the first time block of each batch tile.
    @pl.when(tb == 0)
    def _():
        h_sc[...] = h0_ref[...]
        c_sc[...] = c0_ref[...]

    # ---- Hoisted input projection: ONE matmul for the whole time block ----
    # Staged to VMEM scratch so the recurrence streams one timestep's rows at a
    # time and live ranges stay bounded regardless of T_BLK.
    xp_sc[...] = (jnp.dot(x_ref[...], wih_ref[...],
                          preferred_element_type=jnp.float32) + b_ref[...])

    whh = whh_ref[...]                          # bf16, resident

    def extract_gates(gates):
        # gates: (b_tile, gp) f32, PyTorch order [i | f | g | o] packed at
        # `hidden`-lane offsets.
        if hidden % 128 == 0:
            # Gates already 128-lane aligned: free slices + per-gate EUP ops.
            i_g = jax.nn.sigmoid(gates[:, 0 * hidden:0 * hidden + hp])
            f_g = jax.nn.sigmoid(gates[:, 1 * hidden:1 * hidden + hp])
            g_g = jnp.tanh(gates[:, 2 * hidden:2 * hidden + hp])
            o_g = jax.nn.sigmoid(gates[:, 3 * hidden:3 * hidden + hp])
        else:
            # Packed gates: 2 full-width EUP ops + 3 XLU lane rotations instead
            # of a 4x-wide recurrent matmul.  pltpu.roll follows jnp.roll
            # semantics (lane j -> lane (j + shift) % gp), so shift gp - k*hidden
            # brings gate k to lanes [0, hidden).  Lanes >= hidden carry bounded
            # garbage that only ever multiplies zero rows of W_hh / W1a / W1b,
            # so it never reaches real outputs.
            sig = jax.nn.sigmoid(gates)
            th = jnp.tanh(gates)

            def take(v, k):
                if k:
                    v = pltpu.roll(v, shift=(gp - k * hidden) % gp, axis=1)
                return v[:, :hp]

            i_g, f_g, g_g, o_g = take(sig, 0), take(sig, 1), take(th, 2), take(sig, 3)
        return i_g, f_g, g_g, o_g

    def step(lt, h, c, masked):
        row0 = pl.multiple_of(lt * b_tile, 8)
        gates = xp_sc[pl.ds(row0, b_tile), :] + jnp.dot(
            h.astype(jnp.bfloat16), whh, preferred_element_type=jnp.float32)
        i_g, f_g, g_g, o_g = extract_gates(gates)
        c_new = f_g * c + i_g * g_g
        h_new = o_g * jnp.tanh(c_new)

        if masked:                               # padded timesteps keep previous state
            keep = (tb * t_blk + lt) < seq_len
            h_new = jnp.where(keep, h_new, h)
            c_new = jnp.where(keep, c_new, c)

        @pl.when(jnp.logical_and(tb == 0, lt == 0))
        def _():                                 # LSTM outputs[0]
            hfirst_sc[...] = h_new

        return h_new, c_new

    def run_block(masked):
        def body(lt, carry):
            h, c = carry
            return step(lt, h, c, masked)

        h_fin, c_fin = jax.lax.fori_loop(
            0, t_blk, body, (h_sc[...], c_sc[...]),
            unroll=True if t_blk <= 8 else 4)
        h_sc[...] = h_fin
        c_sc[...] = c_fin

    if needs_mask:
        # Padding only exists in the final time block; every other block runs
        # the mask-free serial path.
        @pl.when(tb == last_tb)
        def _():
            run_block(True)

        @pl.when(tb != last_tb)
        def _():
            run_block(False)
    else:
        run_block(False)

    # ---- Classifier on the last time block: concat(outputs[0], outputs[-1]) ----
    # The lane-dim concat is replaced by two matmuls into one f32 accumulator.
    @pl.when(tb == last_tb)
    def _():
        z = (jnp.dot(hfirst_sc[...].astype(jnp.bfloat16), w1a_ref[...],
                     preferred_element_type=jnp.float32)
             + jnp.dot(h_sc[...].astype(jnp.bfloat16), w1b_ref[...],
                       preferred_element_type=jnp.float32)
             + b1_ref[...])
        # Dropout between the two Linears is identity in eval/inference mode.
        pred = (jnp.dot(z.astype(jnp.bfloat16), w2_ref[...],
                        preferred_element_type=jnp.float32) + b2_ref[...])
        pred_ref[...] = pred.astype(pred_ref.dtype)


def rnn_forward(token_ids, h0, c0, params, *, t_blk=32):
    """token_ids: (seq, batch) int32.  h0/c0: (1, batch, hidden) f32."""
    emb = params["embedding"].astype(jnp.bfloat16)
    S, B = token_ids.shape
    E = emb.shape[1]
    H = h0.shape[-1]
    CH = params["b1"].shape[-1]                  # classifier hidden (256, multiple of 128)
    C = params["b2"].shape[-1]

    G = 4 * H
    GP = _round_up(G, 128)                       # packed gate axis (1 lane-tile when 4H <= 128)
    HP = _round_up(H, 128)                       # state / K-dim padding
    CP = _round_up(C, 128)                       # lane-dense output
    T_BLK = min(t_blk, S)
    SP = _round_up(S, T_BLK)

    BP = _round_up(B, 8)                         # f32 sublane quantum
    # 256-row tiles fill the 256-wide MXUs (v6e/v7x) but only when >= 2 tiles
    # remain so v7x's 2nd TensorCore still gets work; 128 otherwise.
    if BP >= 512:
        B_TILE = 256
    elif BP > 128:
        B_TILE = 128
    else:
        B_TILE = BP
    BP = _round_up(BP, B_TILE)
    NBT = BP // B_TILE

    # Embedding gather (glue).  TODO(synk): fuse in-kernel (scalar-prefetched
    # token ids + DMA gather from the HBM-resident table).
    x = jnp.take(emb, token_ids, axis=0)                              # (S, B, E) bf16
    x = jnp.pad(x, ((0, SP - S), (0, BP - B), (0, 0)))
    # Pre-flatten (time, batch) per batch tile so the kernel never reshapes a
    # non-minor dim: row index inside tile bi is t*B_TILE + b_local.
    x = x.reshape(SP, NBT, B_TILE, E).transpose(1, 0, 2, 3).reshape(NBT, SP * B_TILE, E)

    h0p = jnp.pad(h0[0].astype(jnp.float32), ((0, BP - B), (0, HP - H)))
    c0p = jnp.pad(c0[0].astype(jnp.float32), ((0, BP - B), (0, HP - H)))

    # Packed gate axis: pad 4H -> GP once (zeros), not per gate.
    wih_t = jnp.pad(params["w_ih"].T, ((0, 0), (0, GP - G))).astype(jnp.bfloat16)       # (E, GP)
    whh_t = jnp.pad(params["w_hh"].T, ((0, HP - H), (0, GP - G))).astype(jnp.bfloat16)  # (HP, GP)
    bias = jnp.pad((params["b_ih"] + params["b_hh"]).reshape(1, G),
                   ((0, 0), (0, GP - G))).astype(jnp.float32)                           # (1, GP)

    # TODO(synk): the PyTorch module declares Linear(hidden*4, 256) but its forward
    # feeds a (batch, 2*hidden) concat (non-bidirectional LSTM); the classifier's
    # first layer is sized 2*hidden so the forward path is well-defined.
    w1_t = params["w1"].T                                             # (2H, CH)
    w1a = jnp.pad(w1_t[:H], ((0, HP - H), (0, 0))).astype(jnp.bfloat16)        # (HP, CH)
    w1b = jnp.pad(w1_t[H:2 * H], ((0, HP - H), (0, 0))).astype(jnp.bfloat16)   # (HP, CH)
    b1 = params["b1"].reshape(1, CH).astype(jnp.float32)
    w2p = jnp.pad(params["w2"].T, ((0, 0), (0, CP - C))).astype(jnp.bfloat16)  # (CH, CP)
    b2p = jnp.pad(params["b2"].reshape(1, C),
                  ((0, 0), (0, CP - C))).astype(jnp.float32)

    grid = (NBT, SP // T_BLK)     # (parallel batch tiles, sequential time blocks)
    needs_mask = SP != S

    kernel = functools.partial(
        _rnn_kernel, hidden=H, t_blk=T_BLK, b_tile=B_TILE,
        seq_len=S, needs_mask=needs_mask)

    grid_spec = pltpu.PrefetchScalarGridSpec(
        num_scalar_prefetch=0,
        grid=grid,
        in_specs=[
            pl.BlockSpec((None, T_BLK * B_TILE, E), lambda bi, ti: (bi, ti, 0)),  # x (pre-flattened)
            pl.BlockSpec((B_TILE, HP), lambda bi, ti: (bi, 0)),                   # h0 (per batch tile)
            pl.BlockSpec((B_TILE, HP), lambda bi, ti: (bi, 0)),                   # c0 (per batch tile)
            pl.BlockSpec((E, GP), lambda bi, ti: (0, 0)),                         # W_ih^T (resident)
            pl.BlockSpec((HP, GP), lambda bi, ti: (0, 0)),                        # W_hh^T (resident)
            pl.BlockSpec((1, GP), lambda bi, ti: (0, 0)),                         # fused LSTM bias
            pl.BlockSpec((HP, CH), lambda bi, ti: (0, 0)),                        # W1a (outputs[0] half)
            pl.BlockSpec((HP, CH), lambda bi, ti: (0, 0)),                        # W1b (outputs[-1] half)
            pl.BlockSpec((1, CH), lambda bi, ti: (0, 0)),                         # b1
            pl.BlockSpec((CH, CP), lambda bi, ti: (0, 0)),                        # W2^T
            pl.BlockSpec((1, CP), lambda bi, ti: (0, 0)),                         # b2
        ],
        out_specs=pl.BlockSpec((B_TILE, CP), lambda bi, ti: (bi, 0)),
        scratch_shapes=[
            pltpu.VMEM((B_TILE, HP), jnp.float32),            # h state
            pltpu.VMEM((B_TILE, HP), jnp.float32),            # c state
            pltpu.VMEM((B_TILE, HP), jnp.float32),            # outputs[0]
            pltpu.VMEM((T_BLK * B_TILE, GP), jnp.float32),    # staged input projection
        ],
    )

    pred = pl.pallas_call(
        kernel,
        out_shape=jax.ShapeDtypeStruct((BP, CP), jnp.float32),
        grid_spec=grid_spec,
        compiler_params=pltpu.CompilerParams(
            # With a single batch tile (toy test) the "parallel" axis has one
            # block, so megacore / dual-TC sharding is a no-op there.
            dimension_semantics=("parallel", "arbitrary"),
            vmem_limit_bytes=32 * 1024 * 1024,
        ),
    )(x, h0p, c0p, wih_t, whh_t, bias, w1a, w1b, b1, w2p, b2p)

    return pred[:B, :C]


def rnn_forward_ref(token_ids, h0, c0, params):
    """Pure-JAX f32 reference (same semantics) for sanity checking."""
    emb = params["embedding"]
    x = jnp.take(emb, token_ids, axis=0)
    H = h0.shape[-1]

    def step(carry, x_t):
        h, c = carry
        gates = (x_t @ params["w_ih"].T + params["b_ih"]
                 + h @ params["w_hh"].T + params["b_hh"])
        i = jax.nn.sigmoid(gates[:, 0:H])
        f = jax.nn.sigmoid(gates[:, H:2 * H])
        g = jnp.tanh(gates[:, 2 * H:3 * H])
        o = jax.nn.sigmoid(gates[:, 3 * H:4 * H])
        c = f * c + i * g
        h = o * jnp.tanh(c)
        return (h, c), h

    (_, _), outs = jax.lax.scan(step, (h0[0], c0[0]), x)
    cats = jnp.concatenate([outs[0], outs[-1]], axis=1)
    z = cats @ params["w1"].T + params["b1"]          # Dropout = identity (eval)
    return z @ params["w2"].T + params["b2"]


def make_params(key, vocab, embed_dim, hidden, num_classes):
    ks = jax.random.split(key, 9)
    s = 0.1
    return {
        "embedding": jax.random.normal(ks[0], (vocab, embed_dim), jnp.float32) * s,
        "w_ih": jax.random.normal(ks[1], (4 * hidden, embed_dim), jnp.float32) * s,
        "w_hh": jax.random.normal(ks[2], (4 * hidden, hidden), jnp.float32) * s,
        "b_ih": jax.random.normal(ks[3], (4 * hidden,), jnp.float32) * s,
        "b_hh": jax.random.normal(ks[4], (4 * hidden,), jnp.float32) * s,
        "w1": jax.random.normal(ks[5], (256, 2 * hidden), jnp.float32) * s,
        "b1": jax.random.normal(ks[6], (256,), jnp.float32) * s,
        "w2": jax.random.normal(ks[7], (num_classes, 256), jnp.float32) * s,
        "b2": jax.random.normal(ks[8], (num_classes,), jnp.float32) * s,
    }


if __name__ == "__main__":
    seq_len, batch, vocab, embed_dim, hidden, num_classes = 8, 2, 50, 16, 32, 4

    key = jax.random.PRNGKey(0)
    k_tok, k_par = jax.random.split(key)

    token_ids = jax.random.randint(k_tok, (seq_len, batch), 0, vocab, dtype=jnp.int32)
    params = make_params(k_par, vocab, embed_dim, hidden, num_classes)
    h0 = jnp.zeros((1, batch, hidden), jnp.float32)
    c0 = jnp.zeros((1, batch, hidden), jnp.float32)

    pred = jax.block_until_ready(rnn_forward(token_ids, h0, c0, params))
    ref = jax.block_until_ready(rnn_forward_ref(token_ids, h0, c0, params))

    # bf16 matmul operands (f32 accumulate) -> slightly looser tolerance than pure f32.
    np.testing.assert_allclose(np.asarray(pred), np.asarray(ref), rtol=2e-2, atol=2e-2)

    print("KERNEL_OK")
</pallas_src>

<mosaic_0001>
module attributes {stable_mosaic.version = 11 : i64} {
  func.func @_rnn_kernel(%arg0: i32, %arg1: i32, %arg2: memref<1x64x16xbf16, #tpu.memory_space<vmem>>, %arg3: memref<8x128xf32, #tpu.memory_space<vmem>>, %arg4: memref<8x128xf32, #tpu.memory_space<vmem>>, %arg5: memref<16x128xbf16, #tpu.memory_space<vmem>>, %arg6: memref<128x128xbf16, #tpu.memory_space<vmem>>, %arg7: memref<1x128xf32, #tpu.memory_space<vmem>>, %arg8: memref<128x256xbf16, #tpu.memory_space<vmem>>, %arg9: memref<128x256xbf16, #tpu.memory_space<vmem>>, %arg10: memref<1x256xf32, #tpu.memory_space<vmem>>, %arg11: memref<256x128xbf16, #tpu.memory_space<vmem>>, %arg12: memref<1x128xf32, #tpu.memory_space<vmem>>, %arg13: memref<8x128xf32, #tpu.memory_space<vmem>>, %arg14: memref<8x128xf32, #tpu.memory_space<vmem>>, %arg15: memref<8x128xf32, #tpu.memory_space<vmem>>, %arg16: memref<8x128xf32, #tpu.memory_space<vmem>>, %arg17: memref<64x128xf32, #tpu.memory_space<vmem>>) attributes {dimension_semantics = [#tpu.dimension_semantics<parallel>, #tpu.dimension_semantics<arbitrary>], iteration_bounds = array<i64: 1, 1>, scalar_prefetch = 0 : i64, scratch_operands = 4 : i64, tpu.core_type = #tpu.core_type<tc>, window_params = [{transform_indices = @transform_0, window_bounds = array<i64: 1, 64, 16>}, {transform_indices = @transform_1, window_bounds = array<i64: 8, 128>}, {transform_indices = @transform_2, window_bounds = array<i64: 8, 128>}, {pipeline_mode = #tpu.pipeline_mode<synchronous>, transform_indices = @transform_3, window_bounds = array<i64: 16, 128>}, {pipeline_mode = #tpu.pipeline_mode<synchronous>, transform_indices = @transform_4, window_bounds = array<i64: 128, 128>}, {pipeline_mode = #tpu.pipeline_mode<synchronous>, transform_indices = @transform_5, window_bounds = array<i64: 1, 128>}, {pipeline_mode = #tpu.pipeline_mode<synchronous>, transform_indices = @transform_6, window_bounds = array<i64: 128, 256>}, {pipeline_mode = #tpu.pipeline_mode<synchronous>, transform_indices = @transform_7, window_bounds = array<i64: 128, 256>}, {pipeline_mode = #tpu.pipeline_mode<synchronous>, transform_indices = @transform_8, window_bounds = array<i64: 1, 256>}, {pipeline_mode = #tpu.pipeline_mode<synchronous>, transform_indices = @transform_9, window_bounds = array<i64: 256, 128>}, {pipeline_mode = #tpu.pipeline_mode<synchronous>, transform_indices = @transform_10, window_bounds = array<i64: 1, 128>}, {transform_indices = @transform_11, window_bounds = array<i64: 8, 128>}]} {
    %c0_i32 = arith.constant 0 : i32
    %0 = arith.cmpi eq, %arg1, %c0_i32 : i32
    %1 = arith.extui %0 : i1 to i32
    %c0_i32_0 = arith.constant 0 : i32
    %2 = arith.cmpi ne, %1, %c0_i32_0 : i32
    scf.if %2 {
      %c0_99 = arith.constant 0 : index
      %c0_100 = arith.constant 0 : index
      %227 = vector.load %arg3[%c0_99, %c0_100] : memref<8x128xf32, #tpu.memory_space<vmem>>, vector<8x128xf32>
      %c0_101 = arith.constant 0 : index
      %c0_102 = arith.constant 0 : index
      %228 = vector.load %arg14[%c0_101, %c0_102] : memref<8x128xf32, #tpu.memory_space<vmem>>, vector<8x128xf32>
      tpu.vector_store %arg14[%c0_101, %c0_102], %227 {strides = array<i32>} : memref<8x128xf32, #tpu.memory_space<vmem>>, vector<8x128xf32>,
      %c0_103 = arith.constant 0 : index
      %c0_104 = arith.constant 0 : index
      %229 = vector.load %arg4[%c0_103, %c0_104] : memref<8x128xf32, #tpu.memory_space<vmem>>, vector<8x128xf32>
      %c0_105 = arith.constant 0 : index
      %c0_106 = arith.constant 0 : index
      %230 = vector.load %arg15[%c0_105, %c0_106] : memref<8x128xf32, #tpu.memory_space<vmem>>, vector<8x128xf32>
      tpu.vector_store %arg15[%c0_105, %c0_106], %229 {strides = array<i32>} : memref<8x128xf32, #tpu.memory_space<vmem>>, vector<8x128xf32>,
    } else {
    }
    %c0 = arith.constant 0 : index
    %c0_1 = arith.constant 0 : index
    %c0_2 = arith.constant 0 : index
    %3 = vector.load %arg2[%c0, %c0_1, %c0_2] : memref<1x64x16xbf16, #tpu.memory_space<vmem>>, vector<1x64x16xbf16>
    %4 = vector.shape_cast %3 : vector<1x64x16xbf16> to vector<64x16xbf16>
    %c0_3 = arith.constant 0 : index
    %c0_4 = arith.constant 0 : index
    %5 = vector.load %arg5[%c0_3, %c0_4] : memref<16x128xbf16, #tpu.memory_space<vmem>>, vector<16x128xbf16>
    %cst = arith.constant dense<0.000000e+00> : vector<64x128xf32>
    %6 = tpu.matmul %4, %5, %cst {dimension_numbers = #tpu.dot_dimension_numbers<[1], [0], [0], [1], [0, 0, 1, 1], [], []>} : vector<64x16xbf16>, vector<16x128xbf16>, vector<64x128xf32> -> vector<64x128xf32>
    %c0_5 = arith.constant 0 : index
    %c0_6 = arith.constant 0 : index
    %7 = vector.load %arg7[%c0_5, %c0_6] : memref<1x128xf32, #tpu.memory_space<vmem>>, vector<1x128xf32>
    %8 = vector.broadcast %7 : vector<1x128xf32> to vector<64x128xf32>
    %9 = arith.addf %6, %8 : vector<64x128xf32>
    %c0_7 = arith.constant 0 : index
    %c0_8 = arith.constant 0 : index
    %10 = vector.load %arg17[%c0_7, %c0_8] : memref<64x128xf32, #tpu.memory_space<vmem>>, vector<64x128xf32>
    tpu.vector_store %arg17[%c0_7, %c0_8], %9 {strides = array<i32>} : memref<64x128xf32, #tpu.memory_space<vmem>>, vector<64x128xf32>,
    %c0_9 = arith.constant 0 : index
    %c0_10 = arith.constant 0 : index
    %11 = vector.load %arg6[%c0_9, %c0_10] : memref<128x128xbf16, #tpu.memory_space<vmem>>, vector<128x128xbf16>
    %c0_11 = arith.constant 0 : index
    %c0_12 = arith.constant 0 : index
    %12 = vector.load %arg14[%c0_11, %c0_12] : memref<8x128xf32, #tpu.memory_space<vmem>>, vector<8x128xf32>
    %c0_13 = arith.constant 0 : index
    %c0_14 = arith.constant 0 : index
    %13 = vector.load %arg15[%c0_13, %c0_14] : memref<8x128xf32, #tpu.memory_space<vmem>>, vector<8x128xf32>
    %c0_i32_15 = arith.constant 0 : i32
    %c8_i32 = arith.constant 8 : i32
    %14 = arith.muli %c0_i32_15, %c8_i32 : i32
    %15 = tpu.assume_multiple %14, 8 : i32
    %16 = arith.index_cast %15 : i32 to index
    %c0_16 = arith.constant 0 : index
    %17 = vector.load %arg17[%16, %c0_16] : memref<64x128xf32, #tpu.memory_space<vmem>>, vector<8x128xf32>
    %18 = arith.truncf %12 : vector<8x128xf32> to vector<8x128xbf16>
    %cst_17 = arith.constant dense<0.000000e+00> : vector<8x128xf32>
    %19 = tpu.matmul %18, %11, %cst_17 {dimension_numbers = #tpu.dot_dimension_numbers<[1], [0], [0], [1], [0, 0, 1, 1], [], []>} : vector<8x128xbf16>, vector<128x128xbf16>, vector<8x128xf32> -> vector<8x128xf32>
    %20 = arith.addf %17, %19 : vector<8x128xf32>
    %21 = arith.negf %20 : vector<8x128xf32>
    %22 = math.exp %21 : vector<8x128xf32>
    %cst_18 = arith.constant 1.000000e+00 : f32
    %23 = vector.broadcast %cst_18 : f32 to vector<8x128xf32>
    %24 = arith.addf %23, %22 : vector<8x128xf32>
    %25 = arith.divf %23, %24 : vector<8x128xf32>
    %26 = math.tanh %20 : vector<8x128xf32>
    %c96_i32 = arith.constant 96 : i32
    %27 = tpu.dynamic_rotate %25 by %c96_i32 dim 1 : vector<8x128xf32>, i32 -> vector<8x128xf32>
    %c64_i32 = arith.constant 64 : i32
    %28 = tpu.dynamic_rotate %26 by %c64_i32 dim 1 : vector<8x128xf32>, i32 -> vector<8x128xf32>
    %c32_i32 = arith.constant 32 : i32
    %29 = tpu.dynamic_rotate %25 by %c32_i32 dim 1 : vector<8x128xf32>, i32 -> vector<8x128xf32>
    %30 = arith.mulf %27, %13 : vector<8x128xf32>
    %31 = arith.mulf %25, %28 : vector<8x128xf32>
    %32 = arith.addf %30, %31 : vector<8x128xf32>
    %33 = math.tanh %32 : vector<8x128xf32>
    %34 = arith.mulf %29, %33 : vector<8x128xf32>
    %c0_i32_19 = arith.constant 0 : i32
    %35 = arith.cmpi eq, %arg1, %c0_i32_19 : i32
    %c0_i32_20 = arith.constant 0 : i32
    %36 = arith.cmpi eq, %c0_i32_15, %c0_i32_20 : i32
    %37 = arith.andi %35, %36 : i1
    %38 = arith.extui %37 : i1 to i32
    %c0_i32_21 = arith.constant 0 : i32
    %39 = arith.cmpi ne, %38, %c0_i32_21 : i32
    scf.if %39 {
      %c0_99 = arith.constant 0 : index
      %c0_100 = arith.constant 0 : index
      %227 = vector.load %arg16[%c0_99, %c0_100] : memref<8x128xf32, #tpu.memory_space<vmem>>, vector<8x128xf32>
      tpu.vector_store %arg16[%c0_99, %c0_100], %34 {strides = array<i32>} : memref<8x128xf32, #tpu.memory_space<vmem>>, vector<8x128xf32>,
    } else {
    }
    %c1_i32 = arith.constant 1 : i32
    %c8_i32_22 = arith.constant 8 : i32
    %40 = arith.muli %c1_i32, %c8_i32_22 : i32
    %41 = tpu.assume_multiple %40, 8 : i32
    %42 = arith.index_cast %41 : i32 to index
    %c0_23 = arith.constant 0 : index
    %43 = vector.load %arg17[%42, %c0_23] : memref<64x128xf32, #tpu.memory_space<vmem>>, vector<8x128xf32>
    %44 = arith.truncf %34 : vector<8x128xf32> to vector<8x128xbf16>
    %cst_24 = arith.constant dense<0.000000e+00> : vector<8x128xf32>
    %45 = tpu.matmul %44, %11, %cst_24 {dimension_numbers = #tpu.dot_dimension_numbers<[1], [0], [0], [1], [0, 0, 1, 1], [], []>} : vector<8x128xbf16>, vector<128x128xbf16>, vector<8x128xf32> -> vector<8x128xf32>
    %46 = arith.addf %43, %45 : vector<8x128xf32>
    %47 = arith.negf %46 : vector<8x128xf32>
    %48 = math.exp %47 : vector<8x128xf32>
    %cst_25 = arith.constant 1.000000e+00 : f32
    %49 = vector.broadcast %cst_25 : f32 to vector<8x128xf32>
    %50 = arith.addf %49, %48 : vector<8x128xf32>
    %51 = arith.divf %49, %50 : vector<8x128xf32>
    %52 = math.tanh %46 : vector<8x128xf32>
    %c96_i32_26 = arith.constant 96 : i32
    %53 = tpu.dynamic_rotate %51 by %c96_i32_26 dim 1 : vector<8x128xf32>, i32 -> vector<8x128xf32>
    %c64_i32_27 = arith.constant 64 : i32
    %54 = tpu.dynamic_rotate %52 by %c64_i32_27 dim 1 : vector<8x128xf32>, i32 -> vector<8x128xf32>
    %c32_i32_28 = arith.constant 32 : i32
    %55 = tpu.dynamic_rotate %51 by %c32_i32_28 dim 1 : vector<8x128xf32>, i32 -> vector<8x128xf32>
    %56 = arith.mulf %53, %32 : vector<8x128xf32>
    %57 = arith.mulf %51, %54 : vector<8x128xf32>
    %58 = arith.addf %56, %57 : vector<8x128xf32>
    %59 = math.tanh %58 : vector<8x128xf32>
    %60 = arith.mulf %55, %59 : vector<8x128xf32>
    %c0_i32_29 = arith.constant 0 : i32
    %61 = arith.cmpi eq, %arg1, %c0_i32_29 : i32
    %c0_i32_30 = arith.constant 0 : i32
    %62 = arith.cmpi eq, %c1_i32, %c0_i32_30 : i32
    %63 = arith.andi %61, %62 : i1
    %64 = arith.extui %63 : i1 to i32
    %c0_i32_31 = arith.constant 0 : i32
    %65 = arith.cmpi ne, %64, %c0_i32_31 : i32
    scf.if %65 {
      %c0_99 = arith.constant 0 : index
      %c0_100 = arith.constant 0 : index
      %227 = vector.load %arg16[%c0_99, %c0_100] : memref<8x128xf32, #tpu.memory_space<vmem>>, vector<8x128xf32>
      tpu.vector_store %arg16[%c0_99, %c0_100], %60 {strides = array<i32>} : memref<8x128xf32, #tpu.memory_space<vmem>>, vector<8x128xf32>,
    } else {
    }
    %c2_i32 = arith.constant 2 : i32
    %c8_i32_32 = arith.constant 8 : i32
    %66 = arith.muli %c2_i32, %c8_i32_32 : i32
    %67 = tpu.assume_multiple %66, 8 : i32
    %68 = arith.index_cast %67 : i32 to index
    %c0_33 = arith.constant 0 : index
    %69 = vector.load %arg17[%68, %c0_33] : memref<64x128xf32, #tpu.memory_space<vmem>>, vector<8x128xf32>
    %70 = arith.truncf %60 : vector<8x128xf32> to vector<8x128xbf16>
    %cst_34 = arith.constant dense<0.000000e+00> : vector<8x128xf32>
    %71 = tpu.matmul %70, %11, %cst_34 {dimension_numbers = #tpu.dot_dimension_numbers<[1], [0], [0], [1], [0, 0, 1, 1], [], []>} : vector<8x128xbf16>, vector<128x128xbf16>, vector<8x128xf32> -> vector<8x128xf32>
    %72 = arith.addf %69, %71 : vector<8x128xf32>
    %73 = arith.negf %72 : vector<8x128xf32>
    %74 = math.exp %73 : vector<8x128xf32>
    %cst_35 = arith.constant 1.000000e+00 : f32
    %75 = vector.broadcast %cst_35 : f32 to vector<8x128xf32>
    %76 = arith.addf %75, %74 : vector<8x128xf32>
    %77 = arith.divf %75, %76 : vector<8x128xf32>
    %78 = math.tanh %72 : vector<8x128xf32>
    %c96_i32_36 = arith.constant 96 : i32
    %79 = tpu.dynamic_rotate %77 by %c96_i32_36 dim 1 : vector<8x128xf32>, i32 -> vector<8x128xf32>
    %c64_i32_37 = arith.constant 64 : i32
    %80 = tpu.dynamic_rotate %78 by %c64_i32_37 dim 1 : vector<8x128xf32>, i32 -> vector<8x128xf32>
    %c32_i32_38 = arith.constant 32 : i32
    %81 = tpu.dynamic_rotate %77 by %c32_i32_38 dim 1 : vector<8x128xf32>, i32 -> vector<8x128xf32>
    %82 = arith.mulf %79, %58 : vector<8x128xf32>
    %83 = arith.mulf %77, %80 : vector<8x128xf32>
    %84 = arith.addf %82, %83 : vector<8x128xf32>
    %85 = math.tanh %84 : vector<8x128xf32>
    %86 = arith.mulf %81, %85 : vector<8x128xf32>
    %c0_i32_39 = arith.constant 0 : i32
    %87 = arith.cmpi eq, %arg1, %c0_i32_39 : i32
    %c0_i32_40 = arith.constant 0 : i32
    %88 = arith.cmpi eq, %c2_i32, %c0_i32_40 : i32
    %89 = arith.andi %87, %88 : i1
    %90 = arith.extui %89 : i1 to i32
    %c0_i32_41 = arith.constant 0 : i32
    %91 = arith.cmpi ne, %90, %c0_i32_41 : i32
    scf.if %91 {
      %c0_99 = arith.constant 0 : index
      %c0_100 = arith.constant 0 : index
      %227 = vector.load %arg16[%c0_99, %c0_100] : memref<8x128xf32, #tpu.memory_space<vmem>>, vector<8x128xf32>
      tpu.vector_store %arg16[%c0_99, %c0_100], %86 {strides = array<i32>} : memref<8x128xf32, #tpu.memory_space<vmem>>, vector<8x128xf32>,
    } else {
    }
    %c3_i32 = arith.constant 3 : i32
    %c8_i32_42 = arith.constant 8 : i32
    %92 = arith.muli %c3_i32, %c8_i32_42 : i32
    %93 = tpu.assume_multiple %92, 8 : i32
    %94 = arith.index_cast %93 : i32 to index
    %c0_43 = arith.constant 0 : index
    %95 = vector.load %arg17[%94, %c0_43] : memref<64x128xf32, #tpu.memory_space<vmem>>, vector<8x128xf32>
    %96 = arith.truncf %86 : vector<8x128xf32> to vector<8x128xbf16>
    %cst_44 = arith.constant dense<0.000000e+00> : vector<8x128xf32>
    %97 = tpu.matmul %96, %11, %cst_44 {dimension_numbers = #tpu.dot_dimension_numbers<[1], [0], [0], [1], [0, 0, 1, 1], [], []>} : vector<8x128xbf16>, vector<128x128xbf16>, vector<8x128xf32> -> vector<8x128xf32>
    %98 = arith.addf %95, %97 : vector<8x128xf32>
    %99 = arith.negf %98 : vector<8x128xf32>
    %100 = math.exp %99 : vector<8x128xf32>
    %cst_45 = arith.constant 1.000000e+00 : f32
    %101 = vector.broadcast %cst_45 : f32 to vector<8x128xf32>
    %102 = arith.addf %101, %100 : vector<8x128xf32>
    %103 = arith.divf %101, %102 : vector<8x128xf32>
    %104 = math.tanh %98 : vector<8x128xf32>
    %c96_i32_46 = arith.constant 96 : i32
    %105 = tpu.dynamic_rotate %103 by %c96_i32_46 dim 1 : vector<8x128xf32>, i32 -> vector<8x128xf32>
    %c64_i32_47 = arith.constant 64 : i32
    %106 = tpu.dynamic_rotate %104 by %c64_i32_47 dim 1 : vector<8x128xf32>, i32 -> vector<8x128xf32>
    %c32_i32_48 = arith.constant 32 : i32
    %107 = tpu.dynamic_rotate %103 by %c32_i32_48 dim 1 : vector<8x128xf32>, i32 -> vector<8x128xf32>
    %108 = arith.mulf %105, %84 : vector<8x128xf32>
    %109 = arith.mulf %103, %106 : vector<8x128xf32>
    %110 = arith.addf %108, %109 : vector<8x128xf32>
    %111 = math.tanh %110 : vector<8x128xf32>
    %112 = arith.mulf %107, %111 : vector<8x128xf32>
    %c0_i32_49 = arith.constant 0 : i32
    %113 = arith.cmpi eq, %arg1, %c0_i32_49 : i32
    %c0_i32_50 = arith.constant 0 : i32
    %114 = arith.cmpi eq, %c3_i32, %c0_i32_50 : i32
    %115 = arith.andi %113, %114 : i1
    %116 = arith.extui %115 : i1 to i32
    %c0_i32_51 = arith.constant 0 : i32
    %117 = arith.cmpi ne, %116, %c0_i32_51 : i32
    scf.if %117 {
      %c0_99 = arith.constant 0 : index
      %c0_100 = arith.constant 0 : index
      %227 = vector.load %arg16[%c0_99, %c0_100] : memref<8x128xf32, #tpu.memory_space<vmem>>, vector<8x128xf32>
      tpu.vector_store %arg16[%c0_99, %c0_100], %112 {strides = array<i32>} : memref<8x128xf32, #tpu.memory_space<vmem>>, vector<8x128xf32>,
    } else {
    }
    %c4_i32 = arith.constant 4 : i32
    %c8_i32_52 = arith.constant 8 : i32
    %118 = arith.muli %c4_i32, %c8_i32_52 : i32
    %119 = tpu.assume_multiple %118, 8 : i32
    %120 = arith.index_cast %119 : i32 to index
    %c0_53 = arith.constant 0 : index
    %121 = vector.load %arg17[%120, %c0_53] : memref<64x128xf32, #tpu.memory_space<vmem>>, vector<8x128xf32>
    %122 = arith.truncf %112 : vector<8x128xf32> to vector<8x128xbf16>
    %cst_54 = arith.constant dense<0.000000e+00> : vector<8x128xf32>
    %123 = tpu.matmul %122, %11, %cst_54 {dimension_numbers = #tpu.dot_dimension_numbers<[1], [0], [0], [1], [0, 0, 1, 1], [], []>} : vector<8x128xbf16>, vector<128x128xbf16>, vector<8x128xf32> -> vector<8x128xf32>
    %124 = arith.addf %121, %123 : vector<8x128xf32>
    %125 = arith.negf %124 : vector<8x128xf32>
    %126 = math.exp %125 : vector<8x128xf32>
    %cst_55 = arith.constant 1.000000e+00 : f32
    %127 = vector.broadcast %cst_55 : f32 to vector<8x128xf32>
    %128 = arith.addf %127, %126 : vector<8x128xf32>
    %129 = arith.divf %127, %128 : vector<8x128xf32>
    %130 = math.tanh %124 : vector<8x128xf32>
    %c96_i32_56 = arith.constant 96 : i32
    %131 = tpu.dynamic_rotate %129 by %c96_i32_56 dim 1 : vector<8x128xf32>, i32 -> vector<8x128xf32>
    %c64_i32_57 = arith.constant 64 : i32
    %132 = tpu.dynamic_rotate %130 by %c64_i32_57 dim 1 : vector<8x128xf32>, i32 -> vector<8x128xf32>
    %c32_i32_58 = arith.constant 32 : i32
    %133 = tpu.dynamic_rotate %129 by %c32_i32_58 dim 1 : vector<8x128xf32>, i32 -> vector<8x128xf32>
    %134 = arith.mulf %131, %110 : vector<8x128xf32>
    %135 = arith.mulf %129, %132 : vector<8x128xf32>
    %136 = arith.addf %134, %135 : vector<8x128xf32>
    %137 = math.tanh %136 : vector<8x128xf32>
    %138 = arith.mulf %133, %137 : vector<8x128xf32>
    %c0_i32_59 = arith.constant 0 : i32
    %139 = arith.cmpi eq, %arg1, %c0_i32_59 : i32
    %c0_i32_60 = arith.constant 0 : i32
    %140 = arith.cmpi eq, %c4_i32, %c0_i32_60 : i32
    %141 = arith.andi %139, %140 : i1
    %142 = arith.extui %141 : i1 to i32
    %c0_i32_61 = arith.constant 0 : i32
    %143 = arith.cmpi ne, %142, %c0_i32_61 : i32
    scf.if %143 {
      %c0_99 = arith.constant 0 : index
      %c0_100 = arith.constant 0 : index
      %227 = vector.load %arg16[%c0_99, %c0_100] : memref<8x128xf32, #tpu.memory_space<vmem>>, vector<8x128xf32>
      tpu.vector_store %arg16[%c0_99, %c0_100], %138 {strides = array<i32>} : memref<8x128xf32, #tpu.memory_space<vmem>>, vector<8x128xf32>,
    } else {
    }
    %c5_i32 = arith.constant 5 : i32
    %c8_i32_62 = arith.constant 8 : i32
    %144 = arith.muli %c5_i32, %c8_i32_62 : i32
    %145 = tpu.assume_multiple %144, 8 : i32
    %146 = arith.index_cast %145 : i32 to index
    %c0_63 = arith.constant 0 : index
    %147 = vector.load %arg17[%146, %c0_63] : memref<64x128xf32, #tpu.memory_space<vmem>>, vector<8x128xf32>
    %148 = arith.truncf %138 : vector<8x128xf32> to vector<8x128xbf16>
    %cst_64 = arith.constant dense<0.000000e+00> : vector<8x128xf32>
    %149 = tpu.matmul %148, %11, %cst_64 {dimension_numbers = #tpu.dot_dimension_numbers<[1], [0], [0], [1], [0, 0, 1, 1], [], []>} : vector<8x128xbf16>, vector<128x128xbf16>, vector<8x128xf32> -> vector<8x128xf32>
    %150 = arith.addf %147, %149 : vector<8x128xf32>
    %151 = arith.negf %150 : vector<8x128xf32>
    %152 = math.exp %151 : vector<8x128xf32>
    %cst_65 = arith.constant 1.000000e+00 : f32
    %153 = vector.broadcast %cst_65 : f32 to vector<8x128xf32>
    %154 = arith.addf %153, %152 : vector<8x128xf32>
    %155 = arith.divf %153, %154 : vector<8x128xf32>
    %156 = math.tanh %150 : vector<8x128xf32>
    %c96_i32_66 = arith.constant 96 : i32
    %157 = tpu.dynamic_rotate %155 by %c96_i32_66 dim 1 : vector<8x128xf32>, i32 -> vector<8x128xf32>
    %c64_i32_67 = arith.constant 64 : i32
    %158 = tpu.dynamic_rotate %156 by %c64_i32_67 dim 1 : vector<8x128xf32>, i32 -> vector<8x128xf32>
    %c32_i32_68 = arith.constant 32 : i32
    %159 = tpu.dynamic_rotate %155 by %c32_i32_68 dim 1 : vector<8x128xf32>, i32 -> vector<8x128xf32>
    %160 = arith.mulf %157, %136 : vector<8x128xf32>
    %161 = arith.mulf %155, %158 : vector<8x128xf32>
    %162 = arith.addf %160, %161 : vector<8x128xf32>
    %163 = math.tanh %162 : vector<8x128xf32>
    %164 = arith.mulf %159, %163 : vector<8x128xf32>
    %c0_i32_69 = arith.constant 0 : i32
    %165 = arith.cmpi eq, %arg1, %c0_i32_69 : i32
    %c0_i32_70 = arith.constant 0 : i32
    %166 = arith.cmpi eq, %c5_i32, %c0_i32_70 : i32
    %167 = arith.andi %165, %166 : i1
    %168 = arith.extui %167 : i1 to i32
    %c0_i32_71 = arith.constant 0 : i32
    %169 = arith.cmpi ne, %168, %c0_i32_71 : i32
    scf.if %169 {
      %c0_99 = arith.constant 0 : index
      %c0_100 = arith.constant 0 : index
      %227 = vector.load %arg16[%c0_99, %c0_100] : memref<8x128xf32, #tpu.memory_space<vmem>>, vector<8x128xf32>
      tpu.vector_store %arg16[%c0_99, %c0_100], %164 {strides = array<i32>} : memref<8x128xf32, #tpu.memory_space<vmem>>, vector<8x128xf32>,
    } else {
    }
    %c6_i32 = arith.constant 6 : i32
    %c8_i32_72 = arith.constant 8 : i32
    %170 = arith.muli %c6_i32, %c8_i32_72 : i32
    %171 = tpu.assume_multiple %170, 8 : i32
    %172 = arith.index_cast %171 : i32 to index
    %c0_73 = arith.constant 0 : index
    %173 = vector.load %arg17[%172, %c0_73] : memref<64x128xf32, #tpu.memory_space<vmem>>, vector<8x128xf32>
    %174 = arith.truncf %164 : vector<8x128xf32> to vector<8x128xbf16>
    %cst_74 = arith.constant dense<0.000000e+00> : vector<8x128xf32>
    %175 = tpu.matmul %174, %11, %cst_74 {dimension_numbers = #tpu.dot_dimension_numbers<[1], [0], [0], [1], [0, 0, 1, 1], [], []>} : vector<8x128xbf16>, vector<128x128xbf16>, vector<8x128xf32> -> vector<8x128xf32>
    %176 = arith.addf %173, %175 : vector<8x128xf32>
    %177 = arith.negf %176 : vector<8x128xf32>
    %178 = math.exp %177 : vector<8x128xf32>
    %cst_75 = arith.constant 1.000000e+00 : f32
    %179 = vector.broadcast %cst_75 : f32 to vector<8x128xf32>
    %180 = arith.addf %179, %178 : vector<8x128xf32>
    %181 = arith.divf %179, %180 : vector<8x128xf32>
    %182 = math.tanh %176 : vector<8x128xf32>
    %c96_i32_76 = arith.constant 96 : i32
    %183 = tpu.dynamic_rotate %181 by %c96_i32_76 dim 1 : vector<8x128xf32>, i32 -> vector<8x128xf32>
    %c64_i32_77 = arith.constant 64 : i32
    %184 = tpu.dynamic_rotate %182 by %c64_i32_77 dim 1 : vector<8x128xf32>, i32 -> vector<8x128xf32>
    %c32_i32_78 = arith.constant 32 : i32
    %185 = tpu.dynamic_rotate %181 by %c32_i32_78 dim 1 : vector<8x128xf32>, i32 -> vector<8x128xf32>
    %186 = arith.mulf %183, %162 : vector<8x128xf32>
    %187 = arith.mulf %181, %184 : vector<8x128xf32>
    %188 = arith.addf %186, %187 : vector<8x128xf32>
    %189 = math.tanh %188 : vector<8x128xf32>
    %190 = arith.mulf %185, %189 : vector<8x128xf32>
    %c0_i32_79 = arith.constant 0 : i32
    %191 = arith.cmpi eq, %arg1, %c0_i32_79 : i32
    %c0_i32_80 = arith.constant 0 : i32
    %192 = arith.cmpi eq, %c6_i32, %c0_i32_80 : i32
    %193 = arith.andi %191, %192 : i1
    %194 = arith.extui %193 : i1 to i32
    %c0_i32_81 = arith.constant 0 : i32
    %195 = arith.cmpi ne, %194, %c0_i32_81 : i32
    scf.if %195 {
      %c0_99 = arith.constant 0 : index
      %c0_100 = arith.constant 0 : index
      %227 = vector.load %arg16[%c0_99, %c0_100] : memref<8x128xf32, #tpu.memory_space<vmem>>, vector<8x128xf32>
      tpu.vector_store %arg16[%c0_99, %c0_100], %190 {strides = array<i32>} : memref<8x128xf32, #tpu.memory_space<vmem>>, vector<8x128xf32>,
    } else {
    }
    %c7_i32 = arith.constant 7 : i32
    %c8_i32_82 = arith.constant 8 : i32
    %196 = arith.muli %c7_i32, %c8_i32_82 : i32
    %197 = tpu.assume_multiple %196, 8 : i32
    %198 = arith.index_cast %197 : i32 to index
    %c0_83 = arith.constant 0 : index
    %199 = vector.load %arg17[%198, %c0_83] : memref<64x128xf32, #tpu.memory_space<vmem>>, vector<8x128xf32>
    %200 = arith.truncf %190 : vector<8x128xf32> to vector<8x128xbf16>
    %cst_84 = arith.constant dense<0.000000e+00> : vector<8x128xf32>
    %201 = tpu.matmul %200, %11, %cst_84 {dimension_numbers = #tpu.dot_dimension_numbers<[1], [0], [0], [1], [0, 0, 1, 1], [], []>} : vector<8x128xbf16>, vector<128x128xbf16>, vector<8x128xf32> -> vector<8x128xf32>
    %202 = arith.addf %199, %201 : vector<8x128xf32>
    %203 = arith.negf %202 : vector<8x128xf32>
    %204 = math.exp %203 : vector<8x128xf32>
    %cst_85 = arith.constant 1.000000e+00 : f32
    %205 = vector.broadcast %cst_85 : f32 to vector<8x128xf32>
    %206 = arith.addf %205, %204 : vector<8x128xf32>
    %207 = arith.divf %205, %206 : vector<8x128xf32>
    %208 = math.tanh %202 : vector<8x128xf32>
    %c96_i32_86 = arith.constant 96 : i32
    %209 = tpu.dynamic_rotate %207 by %c96_i32_86 dim 1 : vector<8x128xf32>, i32 -> vector<8x128xf32>
    %c64_i32_87 = arith.constant 64 : i32
    %210 = tpu.dynamic_rotate %208 by %c64_i32_87 dim 1 : vector<8x128xf32>, i32 -> vector<8x128xf32>
    %c32_i32_88 = arith.constant 32 : i32
    %211 = tpu.dynamic_rotate %207 by %c32_i32_88 dim 1 : vector<8x128xf32>, i32 -> vector<8x128xf32>
    %212 = arith.mulf %209, %188 : vector<8x128xf32>
    %213 = arith.mulf %207, %210 : vector<8x128xf32>
    %214 = arith.addf %212, %213 : vector<8x128xf32>
    %215 = math.tanh %214 : vector<8x128xf32>
    %216 = arith.mulf %211, %215 : vector<8x128xf32>
    %c0_i32_89 = arith.constant 0 : i32
    %217 = arith.cmpi eq, %arg1, %c0_i32_89 : i32
    %c0_i32_90 = arith.constant 0 : i32
    %218 = arith.cmpi eq, %c7_i32, %c0_i32_90 : i32
    %219 = arith.andi %217, %218 : i1
    %220 = arith.extui %219 : i1 to i32
    %c0_i32_91 = arith.constant 0 : i32
    %221 = arith.cmpi ne, %220, %c0_i32_91 : i32
    scf.if %221 {
      %c0_99 = arith.constant 0 : index
      %c0_100 = arith.constant 0 : index
      %227 = vector.load %arg16[%c0_99, %c0_100] : memref<8x128xf32, #tpu.memory_space<vmem>>, vector<8x128xf32>
      tpu.vector_store %arg16[%c0_99, %c0_100], %216 {strides = array<i32>} : memref<8x128xf32, #tpu.memory_space<vmem>>, vector<8x128xf32>,
    } else {
    }
    %c8_i32_92 = arith.constant 8 : i32
    %c0_93 = arith.constant 0 : index
    %c0_94 = arith.constant 0 : index
    %222 = vector.load %arg14[%c0_93, %c0_94] : memref<8x128xf32, #tpu.memory_space<vmem>>, vector<8x128xf32>
    tpu.vector_store %arg14[%c0_93, %c0_94], %216 {strides = array<i32>} : memref<8x128xf32, #tpu.memory_space<vmem>>, vector<8x128xf32>,
    %c0_95 = arith.constant 0 : index
    %c0_96 = arith.constant 0 : index
    %223 = vector.load %arg15[%c0_95, %c0_96] : memref<8x128xf32, #tpu.memory_space<vmem>>, vector<8x128xf32>
    tpu.vector_store %arg15[%c0_95, %c0_96], %214 {strides = array<i32>} : memref<8x128xf32, #tpu.memory_space<vmem>>, vector<8x128xf32>,
    %c0_i32_97 = arith.constant 0 : i32
    %224 = arith.cmpi eq, %arg1, %c0_i32_97 : i32
    %225 = arith.extui %224 : i1 to i32
    %c0_i32_98 = arith.constant 0 : i32
    %226 = arith.cmpi ne, %225, %c0_i32_98 : i32
    scf.if %226 {
      %c0_99 = arith.constant 0 : index
      %c0_100 = arith.constant 0 : index
      %227 = vector.load %arg16[%c0_99, %c0_100] : memref<8x128xf32, #tpu.memory_space<vmem>>, vector<8x128xf32>
      %228 = arith.truncf %227 : vector<8x128xf32> to vector<8x128xbf16>
      %c0_101 = arith.constant 0 : index
      %c0_102 = arith.constant 0 : index
      %229 = vector.load %arg8[%c0_101, %c0_102] : memref<128x256xbf16, #tpu.memory_space<vmem>>, vector<128x256xbf16>
      %cst_103 = arith.constant dense<0.000000e+00> : vector<8x256xf32>
      %230 = tpu.matmul %228, %229, %cst_103 {dimension_numbers = #tpu.dot_dimension_numbers<[1], [0], [0], [1], [0, 0, 1, 1], [], []>} : vector<8x128xbf16>, vector<128x256xbf16>, vector<8x256xf32> -> vector<8x256xf32>
      %c0_104 = arith.constant 0 : index
      %c0_105 = arith.constant 0 : index
      %231 = vector.load %arg14[%c0_104, %c0_105] : memref<8x128xf32, #tpu.memory_space<vmem>>, vector<8x128xf32>
      %232 = arith.truncf %231 : vector<8x128xf32> to vector<8x128xbf16>
      %c0_106 = arith.constant 0 : index
      %c0_107 = arith.constant 0 : index
      %233 = vector.load %arg9[%c0_106, %c0_107] : memref<128x256xbf16, #tpu.memory_space<vmem>>, vector<128x256xbf16>
      %cst_108 = arith.constant dense<0.000000e+00> : vector<8x256xf32>
      %234 = tpu.matmul %232, %233, %cst_108 {dimension_numbers = #tpu.dot_dimension_numbers<[1], [0], [0], [1], [0, 0, 1, 1], [], []>} : vector<8x128xbf16>, vector<128x256xbf16>, vector<8x256xf32> -> vector<8x256xf32>
      %235 = arith.addf %230, %234 : vector<8x256xf32>
      %c0_109 = arith.constant 0 : index
      %c0_110 = arith.constant 0 : index
      %236 = vector.load %arg10[%c0_109, %c0_110] : memref<1x256xf32, #tpu.memory_space<vmem>>, vector<1x256xf32>
      %237 = vector.broadcast %236 : vector<1x256xf32> to vector<8x256xf32>
      %238 = arith.addf %235, %237 : vector<8x256xf32>
      %239 = arith.truncf %238 : vector<8x256xf32> to vector<8x256xbf16>
      %c0_111 = arith.constant 0 : index
      %c0_112 = arith.constant 0 : index
      %240 = vector.load %arg11[%c0_111, %c0_112] : memref<256x128xbf16, #tpu.memory_space<vmem>>, vector<256x128xbf16>
      %cst_113 = arith.constant dense<0.000000e+00> : vector<8x128xf32>
      %241 = tpu.matmul %239, %240, %cst_113 {dimension_numbers = #tpu.dot_dimension_numbers<[1], [0], [0], [1], [0, 0, 1, 1], [], []>} : vector<8x256xbf16>, vector<256x128xbf16>, vector<8x128xf32> -> vector<8x128xf32>
      %c0_114 = arith.constant 0 : index
      %c0_115 = arith.constant 0 : index
      %242 = vector.load %arg12[%c0_114, %c0_115] : memref<1x128xf32, #tpu.memory_space<vmem>>, vector<1x128xf32>
      %243 = vector.broadcast %242 : vector<1x128xf32> to vector<8x128xf32>
      %244 = arith.addf %241, %243 : vector<8x128xf32>
      %c0_116 = arith.constant 0 : index
      %c0_117 = arith.constant 0 : index
      %245 = vector.load %arg13[%c0_116, %c0_117] : memref<8x128xf32, #tpu.memory_space<vmem>>, vector<8x128xf32>
      tpu.vector_store %arg13[%c0_116, %c0_117], %244 {strides = array<i32>} : memref<8x128xf32, #tpu.memory_space<vmem>>, vector<8x128xf32>,
    } else {
    }
    return
  }
  func.func @transform_0(%arg0: i32, %arg1: i32) -> (i32, i32, i32) {
    %c0_i32 = arith.constant 0 : i32
    %c0_i32_0 = arith.constant 0 : i32
    return %arg0, %arg1, %c0_i32 : i32, i32, i32
  }
  func.func @transform_1(%arg0: i32, %arg1: i32) -> (i32, i32) {
    %c0_i32 = arith.constant 0 : i32
    %c0_i32_0 = arith.constant 0 : i32
    return %arg0, %c0_i32 : i32, i32
  }
  func.func @transform_2(%arg0: i32, %arg1: i32) -> (i32, i32) {
    %c0_i32 = arith.constant 0 : i32
    %c0_i32_0 = arith.constant 0 : i32
    return %arg0, %c0_i32 : i32, i32
  }
  func.func @transform_3(%arg0: i32, %arg1: i32) -> (i32, i32) {
    %c0_i32 = arith.constant 0 : i32
    %c0_i32_0 = arith.constant 0 : i32
    %c0_i32_1 = arith.constant 0 : i32
    return %c0_i32, %c0_i32_0 : i32, i32
  }
  func.func @transform_4(%arg0: i32, %arg1: i32) -> (i32, i32) {
    %c0_i32 = arith.constant 0 : i32
    %c0_i32_0 = arith.constant 0 : i32
    %c0_i32_1 = arith.constant 0 : i32
    return %c0_i32, %c0_i32_0 : i32, i32
  }
  func.func @transform_5(%arg0: i32, %arg1: i32) -> (i32, i32) {
    %c0_i32 = arith.constant 0 : i32
    %c0_i32_0 = arith.constant 0 : i32
    %c0_i32_1 = arith.constant 0 : i32
    return %c0_i32, %c0_i32_0 : i32, i32
  }
  func.func @transform_6(%arg0: i32, %arg1: i32) -> (i32, i32) {
    %c0_i32 = arith.constant 0 : i32
    %c0_i32_0 = arith.constant 0 : i32
    %c0_i32_1 = arith.constant 0 : i32
    return %c0_i32, %c0_i32_0 : i32, i32
  }
  func.func @transform_7(%arg0: i32, %arg1: i32) -> (i32, i32) {
    %c0_i32 = arith.constant 0 : i32
    %c0_i32_0 = arith.constant 0 : i32
    %c0_i32_1 = arith.constant 0 : i32
    return %c0_i32, %c0_i32_0 : i32, i32
  }
  func.func @transform_8(%arg0: i32, %arg1: i32) -> (i32, i32) {
    %c0_i32 = arith.constant 0 : i32
    %c0_i32_0 = arith.constant 0 : i32
    %c0_i32_1 = arith.constant 0 : i32
    return %c0_i32, %c0_i32_0 : i32, i32
  }
  func.func @transform_9(%arg0: i32, %arg1: i32) -> (i32, i32) {
    %c0_i32 = arith.constant 0 : i32
    %c0_i32_0 = arith.constant 0 : i32
    %c0_i32_1 = arith.constant 0 : i32
    return %c0_i32, %c0_i32_0 : i32, i32
  }
  func.func @transform_10(%arg0: i32, %arg1: i32) -> (i32, i32) {
    %c0_i32 = arith.constant 0 : i32
    %c0_i32_0 = arith.constant 0 : i32
    %c0_i32_1 = arith.constant 0 : i32
    return %c0_i32, %c0_i32_0 : i32, i32
  }
  func.func @transform_11(%arg0: i32, %arg1: i32) -> (i32, i32) {
    %c0_i32 = arith.constant 0 : i32
    %c0_i32_0 = arith.constant 0 : i32
    return %arg0, %c0_i32 : i32, i32
  }
}

</mosaic_0001>

<llo_original>
// kernel: tpu_custom_call.1
$region0: #{tpu_custom_call.1}
  #allocation0 [shape = 'u32[]', space=smem, size = 0x4, offset = 0x4, fixed_abs, tag = 'smem constant byte address 0x4 - core index']
  #allocation1 [shape = 'u32[72,128]{1,0:T(1,128)}', space=vmem, size = 0x9000, scoped, tag = 'internal scratch']
  #allocation2 [shape = 'f32[8,128]{1,0:T(8,128)}', space=vmem, size = 0x1000, scoped, tag = 'scratch operand']
  #allocation3 [shape = 'f32[8,128]{1,0:T(8,128)}', space=vmem, size = 0x1000, scoped, tag = 'scratch operand']
  #allocation4 [shape = 'f32[8,128]{1,0:T(8,128)}', space=vmem, size = 0x1000, scoped, tag = 'scratch operand']
  #allocation5 [shape = 'f32[64,128]{1,0:T(8,128)}', space=vmem, size = 0x8000, scoped, tag = 'scratch operand']
  %s0 = inlined_call_operand.vmem [shape: bf16[1,64,16], index: 0, kind: input, shape index: {}]
  %s1 = inlined_call_operand.vmem [shape: f32[8,128], index: 1, kind: input, shape index: {}]
  %s2 = inlined_call_operand.vmem [shape: f32[8,128], index: 2, kind: input, shape index: {}]
  %s3 = inlined_call_operand.vmem [shape: bf16[16,128], index: 3, kind: input, shape index: {}]
  %s4 = inlined_call_operand.hbm [shape: bf16[128,128], index: 4, kind: input, shape index: {}]
  %s5 = inlined_call_operand.vmem [shape: f32[1,128], index: 5, kind: input, shape index: {}]
  %s6 = inlined_call_operand.hbm [shape: bf16[128,256], index: 6, kind: input, shape index: {}]
  %s7 = inlined_call_operand.hbm [shape: bf16[128,256], index: 7, kind: input, shape index: {}]
  %s8 = inlined_call_operand.vmem [shape: f32[1,256], index: 8, kind: input, shape index: {}]
  %s9 = inlined_call_operand.hbm [shape: bf16[256,128], index: 9, kind: input, shape index: {}]
  %s10 = inlined_call_operand.vmem [shape: f32[1,128], index: 10, kind: input, shape index: {}]
  %s11 = inlined_call_operand.hbm [shape: f32[8,128], index: 11, kind: output, shape index: {}]
  %s12 = sld [smem:[#allocation0]]
  $region82: #{tpu_custom_call.1} parent=0
    _
  %s14 = ssub.s32 1, %s12
  %s15 = scalar_select 0, %s14, %s12
  $region1: #{tpu_custom_call.1} parent=0
    #allocation6 [shape = 'u8[32768]{0}', space=vmem, size = 0x8000, scoped, tag = 'input window, operand 4, single buffered']
    #allocation7 [shape = 's32[1]{0}', space=sflag, size = 0x4, scoped, tag = 'scoped memory for tpu_custom_call.1']
    #allocation8 [shape = 's32[1]{0}', space=sflag, size = 0x4, scoped, tag = 'scoped memory for tpu_custom_call.1']
    #allocation9 [shape = 'u8[65536]{0}', space=vmem, size = 0x10000, scoped, tag = 'input window, operand 6, single buffered']
    #allocation10 [shape = 's32[1]{0}', space=sflag, size = 0x4, scoped, tag = 'scoped memory for tpu_custom_call.1']
    #allocation11 [shape = 'u8[65536]{0}', space=vmem, size = 0x10000, scoped, tag = 'input window, operand 7, single buffered']
    #allocation12 [shape = 'u8[65536]{0}', space=vmem, size = 0x10000, scoped, tag = 'input window, operand 9, single buffered']
    #allocation13 [shape = 's32[1]{0}', space=sflag, size = 0x4, scoped, tag = 'scoped memory for tpu_custom_call.1']
    #allocation14 [shape = 'u8[4096]{0}', space=vmem, size = 0x1000, scoped, tag = 'output window, operand 0, single buffered']
    %16 = vsyncpa [#allocation7], 0
    %17 = vsyncpa [#allocation10], 0
    %18 = vsyncpa [#allocation13], 0
    %19 = vsyncpa [#allocation8], 0
    // Predicated region
    $region2: #{tpu_custom_call.1} parent=1 // pred_check
      _
    $region3: #{tpu_custom_call.1} parent=1 // pred_check_branch
      %21 = sbr.rel (0) target = $region5
    $region4: #{tpu_custom_call.1} parent=1 // pred_region
      _
    $region5: #{tpu_custom_call.1} parent=1 // pred_fallthru
      _
    // Predicated region
    $region6: #{tpu_custom_call.1} parent=1 // pred_check
      _
    $region7: #{tpu_custom_call.1} parent=1 // pred_check_branch
      %23 = sbr.rel (0) target = $region9
    $region8: #{tpu_custom_call.1} parent=1 // pred_region
      _
    $region9: #{tpu_custom_call.1} parent=1 // pred_fallthru
      _
    // Predicated region
    $region10: #{tpu_custom_call.1} parent=1 // pred_check
      _
    $region11: #{tpu_custom_call.1} parent=1 // pred_check_branch
      %25 = sbr.rel (0) target = $region13
    $region12: #{tpu_custom_call.1} parent=1 // pred_region
      _
    $region13: #{tpu_custom_call.1} parent=1 // pred_fallthru
      _
    // Predicated region
    $region14: #{tpu_custom_call.1} parent=1 // pred_check
      _
    $region15: #{tpu_custom_call.1} parent=1 // pred_check_branch
      %27 = sbr.rel (0) target = $region17
    $region16: #{tpu_custom_call.1} parent=1 // pred_region
      _
    $region17: #{tpu_custom_call.1} parent=1 // pred_fallthru
      _
    // Predicated region
    $region18: #{tpu_custom_call.1} parent=1 // pred_check
      _
    $region19: #{tpu_custom_call.1} parent=1 // pred_check_branch
      %29 = sbr.rel (0) target = $region21
    $region20: #{tpu_custom_call.1} parent=1 // pred_region
      %31 = vsyncadd [#allocation7], 0
      %s32 = sshll.u32 %s4, 4
      %s33 = int_to_ptr.hbm [resolvable:$true] %s32
      %s34 = sshll.u32 [#allocation6], 4
      %s35 = int_to_ptr.vmem [resolvable:$true] %s34
      %40 = dma.hbm_to_vmem [thread:$0]  %s33, 1024, %s35, [#allocation7], 64, 64, 4
    $region21: #{tpu_custom_call.1} parent=1 // pred_fallthru
      _
    // Predicated region
    $region22: #{tpu_custom_call.1} parent=1 // pred_check
      _
    $region23: #{tpu_custom_call.1} parent=1 // pred_check_branch
      %42 = sbr.rel (0) target = $region25
    $region24: #{tpu_custom_call.1} parent=1 // pred_region
      _
    $region25: #{tpu_custom_call.1} parent=1 // pred_fallthru
      _
    // Predicated region
    $region26: #{tpu_custom_call.1} parent=1 // pred_check
      _
    $region27: #{tpu_custom_call.1} parent=1 // pred_check_branch
      %44 = sbr.rel (0) target = $region29
    $region28: #{tpu_custom_call.1} parent=1 // pred_region
      %46 = vsyncadd [#allocation10], 0
      %s47 = sshll.u32 %s6, 4
      %s48 = int_to_ptr.hbm [resolvable:$true] %s47
      %s49 = sshll.u32 [#allocation9], 4
      %s50 = int_to_ptr.vmem [resolvable:$true] %s49
      %55 = dma.hbm_to_vmem [thread:$0]  %s48, 2048, %s50, [#allocation10], 128, 128, 8
    $region29: #{tpu_custom_call.1} parent=1 // pred_fallthru
      _
    // Predicated region
    $region30: #{tpu_custom_call.1} parent=1 // pred_check
      _
    $region31: #{tpu_custom_call.1} parent=1 // pred_check_branch
      %57 = sbr.rel (0) target = $region33
    $region32: #{tpu_custom_call.1} parent=1 // pred_region
      %59 = vsyncadd [#allocation10], 0
      %s60 = sshll.u32 %s7, 4
      %s61 = int_to_ptr.hbm [resolvable:$true] %s60
      %s62 = sshll.u32 [#allocation11], 4
      %s63 = int_to_ptr.vmem [resolvable:$true] %s62
      %68 = dma.hbm_to_vmem [thread:$0]  %s61, 2048, %s63, [#allocation10], 128, 128, 8
    $region33: #{tpu_custom_call.1} parent=1 // pred_fallthru
      _
    // Predicated region
    $region34: #{tpu_custom_call.1} parent=1 // pred_check
      _
    $region35: #{tpu_custom_call.1} parent=1 // pred_check_branch
      %70 = sbr.rel (0) target = $region37
    $region36: #{tpu_custom_call.1} parent=1 // pred_region
      _
    $region37: #{tpu_custom_call.1} parent=1 // pred_fallthru
      _
    // Predicated region
    $region38: #{tpu_custom_call.1} parent=1 // pred_check
      _
    $region39: #{tpu_custom_call.1} parent=1 // pred_check_branch
      %72 = sbr.rel (0) target = $region41
    $region40: #{tpu_custom_call.1} parent=1 // pred_region
      %74 = vsyncadd [#allocation13], 0
      %s75 = sshll.u32 %s9, 4
      %s76 = int_to_ptr.hbm [resolvable:$true] %s75
      %s77 = sshll.u32 [#allocation12], 4
      %s78 = int_to_ptr.vmem [resolvable:$true] %s77
      %83 = dma.hbm_to_vmem [thread:$0]  %s76, 2048, %s78, [#allocation13], 64, 64, 4
    $region41: #{tpu_custom_call.1} parent=1 // pred_fallthru
      _
    // Predicated region
    $region42: #{tpu_custom_call.1} parent=1 // pred_check
      _
    $region43: #{tpu_custom_call.1} parent=1 // pred_check_branch
      %85 = sbr.rel (0) target = $region45
    $region44: #{tpu_custom_call.1} parent=1 // pred_region
      _
    $region45: #{tpu_custom_call.1} parent=1 // pred_fallthru
      _
    // Predicated region
    $region46: #{tpu_custom_call.1} parent=1 // pred_check
      _
    $region47: #{tpu_custom_call.1} parent=1 // pred_check_branch
      %87 = sbr.rel (0) target = $region49
    $region48: #{tpu_custom_call.1} parent=1 // pred_region
      %89 = dma.done [#allocation7], 1024
    $region49: #{tpu_custom_call.1} parent=1 // pred_fallthru
      _
    // Predicated region
    $region50: #{tpu_custom_call.1} parent=1 // pred_check
      _
    $region51: #{tpu_custom_call.1} parent=1 // pred_check_branch
      %91 = sbr.rel (0) target = $region53
    $region52: #{tpu_custom_call.1} parent=1 // pred_region
      %93 = dma.done [#allocation10], 2048
    $region53: #{tpu_custom_call.1} parent=1 // pred_fallthru
      _
    // Predicated region
    $region54: #{tpu_custom_call.1} parent=1 // pred_check
      _
    $region55: #{tpu_custom_call.1} parent=1 // pred_check_branch
      %95 = sbr.rel (0) target = $region57
    $region56: #{tpu_custom_call.1} parent=1 // pred_region
      %97 = dma.done [#allocation10], 2048
    $region57: #{tpu_custom_call.1} parent=1 // pred_fallthru
      _
    // Predicated region
    $region58: #{tpu_custom_call.1} parent=1 // pred_check
      _
    $region59: #{tpu_custom_call.1} parent=1 // pred_check_branch
      %99 = sbr.rel (0) target = $region61
    $region60: #{tpu_custom_call.1} parent=1 // pred_region
      %101 = dma.done [#allocation13], 2048
    $region61: #{tpu_custom_call.1} parent=1 // pred_fallthru
      _
    %p103 = scmp.eq.s32.totalorder 0, 0
    // Predicated region
    $region62: #{tpu_custom_call.1} parent=1 // pred_check
      %p104 = pneg %p103
    $region63: #{tpu_custom_call.1} parent=1 // pred_check_branch
      %106 = sbr.rel (%p104) target = $region65
    $region64: #{tpu_custom_call.1} parent=1 // pred_region
      %v107 = vld [vmem:[%s1] sm:$0xff]
      %108 = vst [vmem:[#allocation2] sm:$0xff] %v107
      %v109 = vld [vmem:[%s2] sm:$0xff]
      %110 = vst [vmem:[#allocation3] sm:$0xff] %v109
    $region65: #{tpu_custom_call.1} parent=1 // pred_fallthru
      _
    %v111 = vld [vmem:[%s0] sm:$0xf]
    %v112 = vld [vmem:[%s0 + $0x4] sm:$0xf]
    %v113 = vld [vmem:[%s0 + $0x8] sm:$0xf]
    %v114 = vld [vmem:[%s0 + $0xc] sm:$0xf]
    %v115 = vld [vmem:[%s0 + $0x10] sm:$0xf]
    %v116 = vld [vmem:[%s0 + $0x14] sm:$0xf]
    %v117 = vld [vmem:[%s0 + $0x18] sm:$0xf]
    %v118 = vld [vmem:[%s0 + $0x1c] sm:$0xf]
    %v119 = vld [vmem:[%s3] sm:$0xf]
    %v120 = vld [vmem:[%s3 + $0x4] sm:$0xf]
    %v121 = vld [vmem:[%s5] sm:$0x1]
    %v123 = vperm.slane %v121, 0
    %v133 = vunpack.c.l.b16 %v111
    %v134 = vunpack.c.l.b16 %v112
    %v135 = vunpack.c.l.b16 %v113
    %v136 = vunpack.c.l.b16 %v114
    %v137 = vunpack.c.l.b16 %v115
    %v138 = vunpack.c.l.b16 %v116
    %v139 = vunpack.c.l.b16 %v117
    %v140 = vunpack.c.l.b16 %v118
    %v141 = vpack.c.b16 %v134, %v133
    %v142 = vpack.c.b16 %v136, %v135
    %v143 = vpack.c.b16 %v138, %v137
    %v144 = vpack.c.b16 %v140, %v139
    %v147 = vunpack.c.l.b16 %v119
    %v148 = vunpack.c.l.b16 %v120
    %v149 = vpack.c.b16 %v148, %v147
    %vm151 = vcmask 130048
    %v153 = vsel %vm151, %v141, 0
    %v156 = vsel %vm151, %v142, 0
    %v159 = vsel %vm151, %v143, 0
    %v162 = vsel %vm151, %v144, 0
    %164 = vmatpush.bf16.msra.mxu0 0
    %165 = vmatpush.bf16.msra.mxu0 0
    %166 = vmatpush.bf16.msra.mxu0 0
    %167 = vmatpush.bf16.msra.mxu0 0
    %168 = vmatpush.bf16.msra.mxu0 0
    %169 = vmatpush.bf16.msra.mxu0 0
    %170 = vmatpush.bf16.msra.mxu0 0
    %171 = vmatpush.bf16.msra.mxu0 %v149
    %172 = vmatmul.bf16.gmra.mxu0 %v153
    %v173 = vpop.f32.mrf.mxu0
    %v174 = vadd.f32 %v123, %v173
    %v175 = vpop.f32.mrf.mxu0
    %v176 = vadd.f32 %v123, %v175
    %177 = vmatmul.bf16.gmra.mxu0 %v156
    %v178 = vpop.f32.mrf.mxu0
    %v179 = vadd.f32 %v123, %v178
    %v180 = vpop.f32.mrf.mxu0
    %v181 = vadd.f32 %v123, %v180
    %182 = vmatmul.bf16.gmra.mxu0 %v159
    %v183 = vpop.f32.mrf.mxu0
    %v184 = vadd.f32 %v123, %v183
    %v185 = vpop.f32.mrf.mxu0
    %v186 = vadd.f32 %v123, %v185
    %187 = vmatmul.bf16.gmra.mxu0 %v162
    %v188 = vpop.f32.mrf.mxu0
    %v189 = vadd.f32 %v123, %v188
    %v190 = vpop.f32.mrf.mxu0
    %v191 = vadd.f32 %v123, %v190
    %192 = vdwg.mxu0
    %193 = vst [vmem:[#allocation5] sm:$0xff] %v174
    %194 = vst [vmem:[#allocation5 + $0x8] sm:$0xff] %v176
    %195 = vst [vmem:[#allocation5 + $0x10] sm:$0xff] %v179
    %196 = vst [vmem:[#allocation5 + $0x18] sm:$0xff] %v181
    %197 = vst [vmem:[#allocation5 + $0x20] sm:$0xff] %v184
    %198 = vst [vmem:[#allocation5 + $0x28] sm:$0xff] %v186
    %199 = vst [vmem:[#allocation5 + $0x30] sm:$0xff] %v189
    %200 = vst [vmem:[#allocation5 + $0x38] sm:$0xff] %v191
    %v201 = vld [vmem:[#allocation6] sm:$0xf]
    %v202 = vld [vmem:[#allocation6 + $0x4] sm:$0xf]
    %v203 = vld [vmem:[#allocation6 + $0x8] sm:$0xf]
    %v204 = vld [vmem:[#allocation6 + $0xc] sm:$0xf]
    %v205 = vld [vmem:[#allocation6 + $0x10] sm:$0xf]
    %v206 = vld [vmem:[#allocation6 + $0x14] sm:$0xf]
    %v207 = vld [vmem:[#allocation6 + $0x18] sm:$0xf]
    %v208 = vld [vmem:[#allocation6 + $0x1c] sm:$0xf]
    %v209 = vld [vmem:[#allocation6 + $0x20] sm:$0xf]
    %v210 = vld [vmem:[#allocation6 + $0x24] sm:$0xf]
    %v211 = vld [vmem:[#allocation6 + $0x28] sm:$0xf]
    %v212 = vld [vmem:[#allocation6 + $0x2c] sm:$0xf]
    %v213 = vld [vmem:[#allocation6 + $0x30] sm:$0xf]
    %v214 = vld [vmem:[#allocation6 + $0x34] sm:$0xf]
    %v215 = vld [vmem:[#allocation6 + $0x38] sm:$0xf]
    %v216 = vld [vmem:[#allocation6 + $0x3c] sm:$0xf]
    %v217 = vld [vmem:[#allocation2] sm:$0xff]
    %v218 = vld [vmem:[#allocation3] sm:$0xff]
    %v219 = vld [vmem:[#allocation5] sm:$0xff]
    %v220 = vpack.c.bf16 %v217, %v217
    %v237 = vunpack.c.l.b16 %v201
    %v238 = vunpack.c.l.b16 %v202
    %v239 = vunpack.c.l.b16 %v203
    %v240 = vunpack.c.l.b16 %v204
    %v241 = vunpack.c.l.b16 %v205
    %v242 = vunpack.c.l.b16 %v206
    %v243 = vunpack.c.l.b16 %v207
    %v244 = vunpack.c.l.b16 %v208
    %v245 = vunpack.c.l.b16 %v209
    %v246 = vunpack.c.l.b16 %v210
    %v247 = vunpack.c.l.b16 %v211
    %v248 = vunpack.c.l.b16 %v212
    %v249 = vunpack.c.l.b16 %v213
    %v250 = vunpack.c.l.b16 %v214
    %v251 = vunpack.c.l.b16 %v215
    %v252 = vunpack.c.l.b16 %v216
    %v253 = vpack.c.b16 %v238, %v237
    %v254 = vpack.c.b16 %v240, %v239
    %v255 = vpack.c.b16 %v242, %v241
    %v256 = vpack.c.b16 %v244, %v243
    %v257 = vpack.c.b16 %v246, %v245
    %v258 = vpack.c.b16 %v248, %v247
    %v259 = vpack.c.b16 %v250, %v249
    %v260 = vpack.c.b16 %v252, %v251
    %269 = vmatpush.bf16.msra.mxu0 %v260
    %270 = vmatpush.bf16.msra.mxu0 %v259
    %271 = vmatpush.bf16.msra.mxu0 %v258
    %272 = vmatpush.bf16.msra.mxu0 %v257
    %273 = vmatpush.bf16.msra.mxu0 %v256
    %274 = vmatpush.bf16.msra.mxu0 %v255
    %275 = vmatpush.bf16.msra.mxu0 %v254
    %276 = vmatpush.bf16.msra.mxu0 %v253
    %277 = vmatmul.bf16.gmra.mxu0 %v220
    %v278 = vpop.f32.mrf.mxu0
    %v279 = vadd.f32 0.0, %v278
    %v280 = vpop.f32.mrf.mxu0
    %281 = vdwg.mxu0
    %v282 = vadd.f32 %v219, %v279
    %v283 = vxor.u32 %v282, 2147483648
    %v284 = vmul.f32 %v283, 1.442695
    %v285 = vpow.pop %v284
    %v286 = vadd.f32 %v285, 1.0
    %v287 = vrcp.pop %v286
    %v288 = vmul.f32 %v286, %v287
    %v289 = vsub.f32 1.0, %v288
    %v290 = vmul.f32 %v287, %v289
    %v291 = vadd.f32 %v287, %v290
    %vm292 = vweird.f32 %v286
    %vm293 = vweird.f32 %v287
    %vm294 = vmor %vm292, %vm293
    %v295 = vsel %vm294, %v287, %v291
    %v296 = vand.u32 2147483647, %v286
    %vm297 = vcmp.eq.f32.partialorder %v296, 8.507059e+37
    %v298 = vand.u32 %v286, 2147483648
    %v299 = vor.u32 1.1754944e-38, %v298
    %v300 = vsel %vm297, %v299, %v295
    %v301 = vmul.f32 1.0, %v300
    %v302 = vtanh.pop %v282
    %303 = vrot.lane.b32.xlu0 %v301, 96
    %v304 = vpop.permute.xlu0 %303
    %305 = vrot.lane.b32.xlu0 %v302, 64
    %v306 = vpop.permute.xlu0 %305
    %307 = vrot.lane.b32.xlu0 %v301, 32
    %v308 = vpop.permute.xlu0 %307
    %v309 = vmul.f32 %v304, %v218
    %v310 = vmul.f32 %v301, %v306
    %v311 = vadd.f32 %v309, %v310
    %v312 = vtanh.pop %v311
    %v313 = vmul.f32 %v308, %v312
    // Predicated region
    $region66: #{tpu_custom_call.1} parent=1 // pred_check
      %p314 = pneg %p103
    $region67: #{tpu_custom_call.1} parent=1 // pred_check_branch
      %316 = sbr.rel (%p314) target = $region69
    $region68: #{tpu_custom_call.1} parent=1 // pred_region
      %317 = vst [vmem:[#allocation4] sm:$0xff] %v313
    $region69: #{tpu_custom_call.1} parent=1 // pred_fallthru
      _
    %s318 = scalar_lea.vmem [#allocation5], 8
    %v319 = vld [vmem:[%s318] sm:$0xff]
    %v320 = vpack.c.bf16 %v313, %v313
    %321 = vmatpush.bf16.msra.mxu0 %v260
    %322 = vmatpush.bf16.msra.mxu0 %v259
    %323 = vmatpush.bf16.msra.mxu0 %v258
    %324 = vmatpush.bf16.msra.mxu0 %v257
    %325 = vmatpush.bf16.msra.mxu0 %v256
    %326 = vmatpush.bf16.msra.mxu0 %v255
    %327 = vmatpush.bf16.msra.mxu0 %v254
    %328 = vmatpush.bf16.msra.mxu0 %v253
    %329 = vmatmul.bf16.gmra.mxu0 %v320
    %v330 = vpop.f32.mrf.mxu0
    %v331 = vadd.f32 0.0, %v330
    %v332 = vpop.f32.mrf.mxu0
    %333 = vdwg.mxu0
    %v334 = vadd.f32 %v319, %v331
    %v335 = vxor.u32 %v334, 2147483648
    %v336 = vmul.f32 %v335, 1.442695
    %v337 = vpow.pop %v336
    %v338 = vadd.f32 %v337, 1.0
    %v339 = vrcp.pop %v338
    %v340 = vmul.f32 %v338, %v339
    %v341 = vsub.f32 1.0, %v340
    %v342 = vmul.f32 %v339, %v341
    %v343 = vadd.f32 %v339, %v342
    %vm344 = vweird.f32 %v338
    %vm345 = vweird.f32 %v339
    %vm346 = vmor %vm344, %vm345
    %v347 = vsel %vm346, %v339, %v343
    %v348 = vand.u32 2147483647, %v338
    %vm349 = vcmp.eq.f32.partialorder %v348, 8.507059e+37
    %v350 = vand.u32 %v338, 2147483648
    %v351 = vor.u32 1.1754944e-38, %v350
    %v352 = vsel %vm349, %v351, %v347
    %v353 = vmul.f32 1.0, %v352
    %v354 = vtanh.pop %v334
    %355 = vrot.lane.b32.xlu0 %v353, 96
    %v356 = vpop.permute.xlu0 %355
    %357 = vrot.lane.b32.xlu0 %v354, 64
    %v358 = vpop.permute.xlu0 %357
    %359 = vrot.lane.b32.xlu0 %v353, 32
    %v360 = vpop.permute.xlu0 %359
    %v361 = vmul.f32 %v356, %v311
    %v362 = vmul.f32 %v353, %v358
    %v363 = vadd.f32 %v361, %v362
    %v364 = vtanh.pop %v363
    %v365 = vmul.f32 %v360, %v364
    %s366 = scalar_lea.vmem [#allocation5], 16
    %v367 = vld [vmem:[%s366] sm:$0xff]
    %v368 = vpack.c.bf16 %v365, %v365
    %369 = vmatpush.bf16.msra.mxu0 %v260
    %370 = vmatpush.bf16.msra.mxu0 %v259
    %371 = vmatpush.bf16.msra.mxu0 %v258
    %372 = vmatpush.bf16.msra.mxu0 %v257
    %373 = vmatpush.bf16.msra.mxu0 %v256
    %374 = vmatpush.bf16.msra.mxu0 %v255
    %375 = vmatpush.bf16.msra.mxu0 %v254
    %376 = vmatpush.bf16.msra.mxu0 %v253
    %377 = vmatmul.bf16.gmra.mxu0 %v368
    %v378 = vpop.f32.mrf.mxu0
    %v379 = vadd.f32 0.0, %v378
    %v380 = vpop.f32.mrf.mxu0
    %381 = vdwg.mxu0
    %v382 = vadd.f32 %v367, %v379
    %v383 = vxor.u32 %v382, 2147483648
    %v384 = vmul.f32 %v383, 1.442695
    %v385 = vpow.pop %v384
    %v386 = vadd.f32 %v385, 1.0
    %v387 = vrcp.pop %v386
    %v388 = vmul.f32 %v386, %v387
    %v389 = vsub.f32 1.0, %v388
    %v390 = vmul.f32 %v387, %v389
    %v391 = vadd.f32 %v387, %v390
    %vm392 = vweird.f32 %v386
    %vm393 = vweird.f32 %v387
    %vm394 = vmor %vm392, %vm393
    %v395 = vsel %vm394, %v387, %v391
    %v396 = vand.u32 2147483647, %v386
    %vm397 = vcmp.eq.f32.partialorder %v396, 8.507059e+37
    %v398 = vand.u32 %v386, 2147483648
    %v399 = vor.u32 1.1754944e-38, %v398
    %v400 = vsel %vm397, %v399, %v395
    %v401 = vmul.f32 1.0, %v400
    %v402 = vtanh.pop %v382
    %403 = vrot.lane.b32.xlu0 %v401, 96
    %v404 = vpop.permute.xlu0 %403
    %405 = vrot.lane.b32.xlu0 %v402, 64
    %v406 = vpop.permute.xlu0 %405
    %407 = vrot.lane.b32.xlu0 %v401, 32
    %v408 = vpop.permute.xlu0 %407
    %v409 = vmul.f32 %v404, %v363
    %v410 = vmul.f32 %v401, %v406
    %v411 = vadd.f32 %v409, %v410
    %v412 = vtanh.pop %v411
    %v413 = vmul.f32 %v408, %v412
    %s414 = scalar_lea.vmem [#allocation5], 24
    %v415 = vld [vmem:[%s414] sm:$0xff]
    %v416 = vpack.c.bf16 %v413, %v413
    %417 = vmatpush.bf16.msra.mxu0 %v260
    %418 = vmatpush.bf16.msra.mxu0 %v259
    %419 = vmatpush.bf16.msra.mxu0 %v258
    %420 = vmatpush.bf16.msra.mxu0 %v257
    %421 = vmatpush.bf16.msra.mxu0 %v256
    %422 = vmatpush.bf16.msra.mxu0 %v255
    %423 = vmatpush.bf16.msra.mxu0 %v254
    %424 = vmatpush.bf16.msra.mxu0 %v253
    %425 = vmatmul.bf16.gmra.mxu0 %v416
    %v426 = vpop.f32.mrf.mxu0
    %v427 = vadd.f32 0.0, %v426
    %v428 = vpop.f32.mrf.mxu0
    %429 = vdwg.mxu0
    %v430 = vadd.f32 %v415, %v427
    %v431 = vxor.u32 %v430, 2147483648
    %v432 = vmul.f32 %v431, 1.442695
    %v433 = vpow.pop %v432
    %v434 = vadd.f32 %v433, 1.0
    %v435 = vrcp.pop %v434
    %v436 = vmul.f32 %v434, %v435
    %v437 = vsub.f32 1.0, %v436
    %v438 = vmul.f32 %v435, %v437
    %v439 = vadd.f32 %v435, %v438
    %vm440 = vweird.f32 %v434
    %vm441 = vweird.f32 %v435
    %vm442 = vmor %vm440, %vm441
    %v443 = vsel %vm442, %v435, %v439
    %v444 = vand.u32 2147483647, %v434
    %vm445 = vcmp.eq.f32.partialorder %v444, 8.507059e+37
    %v446 = vand.u32 %v434, 2147483648
    %v447 = vor.u32 1.1754944e-38, %v446
    %v448 = vsel %vm445, %v447, %v443
    %v449 = vmul.f32 1.0, %v448
    %v450 = vtanh.pop %v430
    %451 = vrot.lane.b32.xlu0 %v449, 96
    %v452 = vpop.permute.xlu0 %451
    %453 = vrot.lane.b32.xlu0 %v450, 64
    %v454 = vpop.permute.xlu0 %453
    %455 = vrot.lane.b32.xlu0 %v449, 32
    %v456 = vpop.permute.xlu0 %455
    %v457 = vmul.f32 %v452, %v411
    %v458 = vmul.f32 %v449, %v454
    %v459 = vadd.f32 %v457, %v458
    %v460 = vtanh.pop %v459
    %v461 = vmul.f32 %v456, %v460
    %s462 = scalar_lea.vmem [#allocation5], 32
    %v463 = vld [vmem:[%s462] sm:$0xff]
    %v464 = vpack.c.bf16 %v461, %v461
    %465 = vmatpush.bf16.msra.mxu0 %v260
    %466 = vmatpush.bf16.msra.mxu0 %v259
    %467 = vmatpush.bf16.msra.mxu0 %v258
    %468 = vmatpush.bf16.msra.mxu0 %v257
    %469 = vmatpush.bf16.msra.mxu0 %v256
    %470 = vmatpush.bf16.msra.mxu0 %v255
    %471 = vmatpush.bf16.msra.mxu0 %v254
    %472 = vmatpush.bf16.msra.mxu0 %v253
    %473 = vmatmul.bf16.gmra.mxu0 %v464
    %v474 = vpop.f32.mrf.mxu0
    %v475 = vadd.f32 0.0, %v474
    %v476 = vpop.f32.mrf.mxu0
    %477 = vdwg.mxu0
    %v478 = vadd.f32 %v463, %v475
    %v479 = vxor.u32 %v478, 2147483648
    %v480 = vmul.f32 %v479, 1.442695
    %v481 = vpow.pop %v480
    %v482 = vadd.f32 %v481, 1.0
    %v483 = vrcp.pop %v482
    %v484 = vmul.f32 %v482, %v483
    %v485 = vsub.f32 1.0, %v484
    %v486 = vmul.f32 %v483, %v485
    %v487 = vadd.f32 %v483, %v486
    %vm488 = vweird.f32 %v482
    %vm489 = vweird.f32 %v483
    %vm490 = vmor %vm488, %vm489
    %v491 = vsel %vm490, %v483, %v487
    %v492 = vand.u32 2147483647, %v482
    %vm493 = vcmp.eq.f32.partialorder %v492, 8.507059e+37
    %v494 = vand.u32 %v482, 2147483648
    %v495 = vor.u32 1.1754944e-38, %v494
    %v496 = vsel %vm493, %v495, %v491
    %v497 = vmul.f32 1.0, %v496
    %v498 = vtanh.pop %v478
    %499 = vrot.lane.b32.xlu0 %v497, 96
    %v500 = vpop.permute.xlu0 %499
    %501 = vrot.lane.b32.xlu0 %v498, 64
    %v502 = vpop.permute.xlu0 %501
    %503 = vrot.lane.b32.xlu0 %v497, 32
    %v504 = vpop.permute.xlu0 %503
    %v505 = vmul.f32 %v500, %v459
    %v506 = vmul.f32 %v497, %v502
    %v507 = vadd.f32 %v505, %v506
    %v508 = vtanh.pop %v507
    %v509 = vmul.f32 %v504, %v508
    %s510 = scalar_lea.vmem [#allocation5], 40
    %v511 = vld [vmem:[%s510] sm:$0xff]
    %v512 = vpack.c.bf16 %v509, %v509
    %513 = vmatpush.bf16.msra.mxu0 %v260
    %514 = vmatpush.bf16.msra.mxu0 %v259
    %515 = vmatpush.bf16.msra.mxu0 %v258
    %516 = vmatpush.bf16.msra.mxu0 %v257
    %517 = vmatpush.bf16.msra.mxu0 %v256
    %518 = vmatpush.bf16.msra.mxu0 %v255
    %519 = vmatpush.bf16.msra.mxu0 %v254
    %520 = vmatpush.bf16.msra.mxu0 %v253
    %521 = vmatmul.bf16.gmra.mxu0 %v512
    %v522 = vpop.f32.mrf.mxu0
    %v523 = vadd.f32 0.0, %v522
    %v524 = vpop.f32.mrf.mxu0
    %525 = vdwg.mxu0
    %v526 = vadd.f32 %v511, %v523
    %v527 = vxor.u32 %v526, 2147483648
    %v528 = vmul.f32 %v527, 1.442695
    %v529 = vpow.pop %v528
    %v530 = vadd.f32 %v529, 1.0
    %v531 = vrcp.pop %v530
    %v532 = vmul.f32 %v530, %v531
    %v533 = vsub.f32 1.0, %v532
    %v534 = vmul.f32 %v531, %v533
    %v535 = vadd.f32 %v531, %v534
    %vm536 = vweird.f32 %v530
    %vm537 = vweird.f32 %v531
    %vm538 = vmor %vm536, %vm537
    %v539 = vsel %vm538, %v531, %v535
    %v540 = vand.u32 2147483647, %v530
    %vm541 = vcmp.eq.f32.partialorder %v540, 8.507059e+37
    %v542 = vand.u32 %v530, 2147483648
    %v543 = vor.u32 1.1754944e-38, %v542
    %v544 = vsel %vm541, %v543, %v539
    %v545 = vmul.f32 1.0, %v544
    %v546 = vtanh.pop %v526
    %547 = vrot.lane.b32.xlu0 %v545, 96
    %v548 = vpop.permute.xlu0 %547
    %549 = vrot.lane.b32.xlu0 %v546, 64
    %v550 = vpop.permute.xlu0 %549
    %551 = vrot.lane.b32.xlu0 %v545, 32
    %v552 = vpop.permute.xlu0 %551
    %v553 = vmul.f32 %v548, %v507
    %v554 = vmul.f32 %v545, %v550
    %v555 = vadd.f32 %v553, %v554
    %v556 = vtanh.pop %v555
    %v557 = vmul.f32 %v552, %v556
    %s558 = scalar_lea.vmem [#allocation5], 48
    %v559 = vld [vmem:[%s558] sm:$0xff]
    %v560 = vpack.c.bf16 %v557, %v557
    %561 = vmatpush.bf16.msra.mxu0 %v260
    %562 = vmatpush.bf16.msra.mxu0 %v259
    %563 = vmatpush.bf16.msra.mxu0 %v258
    %564 = vmatpush.bf16.msra.mxu0 %v257
    %565 = vmatpush.bf16.msra.mxu0 %v256
    %566 = vmatpush.bf16.msra.mxu0 %v255
    %567 = vmatpush.bf16.msra.mxu0 %v254
    %568 = vmatpush.bf16.msra.mxu0 %v253
    %569 = vmatmul.bf16.gmra.mxu0 %v560
    %v570 = vpop.f32.mrf.mxu0
    %v571 = vadd.f32 0.0, %v570
    %v572 = vpop.f32.mrf.mxu0
    %573 = vdwg.mxu0
    %v574 = vadd.f32 %v559, %v571
    %v575 = vxor.u32 %v574, 2147483648
    %v576 = vmul.f32 %v575, 1.442695
    %v577 = vpow.pop %v576
    %v578 = vadd.f32 %v577, 1.0
    %v579 = vrcp.pop %v578
    %v580 = vmul.f32 %v578, %v579
    %v581 = vsub.f32 1.0, %v580
    %v582 = vmul.f32 %v579, %v581
    %v583 = vadd.f32 %v579, %v582
    %vm584 = vweird.f32 %v578
    %vm585 = vweird.f32 %v579
    %vm586 = vmor %vm584, %vm585
    %v587 = vsel %vm586, %v579, %v583
    %v588 = vand.u32 2147483647, %v578
    %vm589 = vcmp.eq.f32.partialorder %v588, 8.507059e+37
    %v590 = vand.u32 %v578, 2147483648
    %v591 = vor.u32 1.1754944e-38, %v590
    %v592 = vsel %vm589, %v591, %v587
    %v593 = vmul.f32 1.0, %v592
    %v594 = vtanh.pop %v574
    %595 = vrot.lane.b32.xlu0 %v593, 96
    %v596 = vpop.permute.xlu0 %595
    %597 = vrot.lane.b32.xlu0 %v594, 64
    %v598 = vpop.permute.xlu0 %597
    %599 = vrot.lane.b32.xlu0 %v593, 32
    %v600 = vpop.permute.xlu0 %599
    %v601 = vmul.f32 %v596, %v555
    %v602 = vmul.f32 %v593, %v598
    %v603 = vadd.f32 %v601, %v602
    %v604 = vtanh.pop %v603
    %v605 = vmul.f32 %v600, %v604
    %s606 = scalar_lea.vmem [#allocation5], 56
    %v607 = vld [vmem:[%s606] sm:$0xff]
    %v608 = vpack.c.bf16 %v605, %v605
    %609 = vmatpush.bf16.msra.mxu0 %v260
    %610 = vmatpush.bf16.msra.mxu0 %v259
    %611 = vmatpush.bf16.msra.mxu0 %v258
    %612 = vmatpush.bf16.msra.mxu0 %v257
    %613 = vmatpush.bf16.msra.mxu0 %v256
    %614 = vmatpush.bf16.msra.mxu0 %v255
    %615 = vmatpush.bf16.msra.mxu0 %v254
    %616 = vmatpush.bf16.msra.mxu0 %v253
    %617 = vmatmul.bf16.gmra.mxu0 %v608
    %v618 = vpop.f32.mrf.mxu0
    %v619 = vadd.f32 0.0, %v618
    %v620 = vpop.f32.mrf.mxu0
    %621 = vdwg.mxu0
    %v622 = vadd.f32 %v607, %v619
    %v623 = vxor.u32 %v622, 2147483648
    %v624 = vmul.f32 %v623, 1.442695
    %v625 = vpow.pop %v624
    %v626 = vadd.f32 %v625, 1.0
    %v627 = vrcp.pop %v626
    %v628 = vmul.f32 %v626, %v627
    %v629 = vsub.f32 1.0, %v628
    %v630 = vmul.f32 %v627, %v629
    %v631 = vadd.f32 %v627, %v630
    %vm632 = vweird.f32 %v626
    %vm633 = vweird.f32 %v627
    %vm634 = vmor %vm632, %vm633
    %v635 = vsel %vm634, %v627, %v631
    %v636 = vand.u32 2147483647, %v626
    %vm637 = vcmp.eq.f32.partialorder %v636, 8.507059e+37
    %v638 = vand.u32 %v626, 2147483648
    %v639 = vor.u32 1.1754944e-38, %v638
    %v640 = vsel %vm637, %v639, %v635
    %v641 = vmul.f32 1.0, %v640
    %v642 = vtanh.pop %v622
    %643 = vrot.lane.b32.xlu0 %v641, 96
    %v644 = vpop.permute.xlu0 %643
    %645 = vrot.lane.b32.xlu0 %v642, 64
    %v646 = vpop.permute.xlu0 %645
    %647 = vrot.lane.b32.xlu0 %v641, 32
    %v648 = vpop.permute.xlu0 %647
    %v649 = vmul.f32 %v644, %v603
    %v650 = vmul.f32 %v641, %v646
    %v651 = vadd.f32 %v649, %v650
    %v652 = vtanh.pop %v651
    %v653 = vmul.f32 %v648, %v652
    %654 = vst [vmem:[#allocation2] sm:$0xff] %v653
    %655 = vst [vmem:[#allocation3] sm:$0xff] %v651
    // Predicated region
    $region70: #{tpu_custom_call.1} parent=1 // pred_check
      %p656 = pneg %p103
    $region71: #{tpu_custom_call.1} parent=1 // pred_check_branch
      %658 = sbr.rel (%p656) target = $region73
    $region72: #{tpu_custom_call.1} parent=1 // pred_region
      %v659 = vld [vmem:[#allocation4] sm:$0xff]
      %v660 = vpack.c.bf16 %v659, %v659
      %v661 = vld [vmem:[#allocation9] sm:$0xff]
      %v662 = vld [vmem:[#allocation9 + $0x8] sm:$0xff]
      %v663 = vld [vmem:[#allocation9 + $0x10] sm:$0xff]
      %v664 = vld [vmem:[#allocation9 + $0x18] sm:$0xff]
      %v665 = vld [vmem:[#allocation9 + $0x20] sm:$0xff]
      %v666 = vld [vmem:[#allocation9 + $0x28] sm:$0xff]
      %v667 = vld [vmem:[#allocation9 + $0x30] sm:$0xff]
      %v668 = vld [vmem:[#allocation9 + $0x38] sm:$0xff]
      %v669 = vld [vmem:[#allocation9 + $0x40] sm:$0xff]
      %v670 = vld [vmem:[#allocation9 + $0x48] sm:$0xff]
      %v671 = vld [vmem:[#allocation9 + $0x50] sm:$0xff]
      %v672 = vld [vmem:[#allocation9 + $0x58] sm:$0xff]
      %v673 = vld [vmem:[#allocation9 + $0x60] sm:$0xff]
      %v674 = vld [vmem:[#allocation9 + $0x68] sm:$0xff]
      %v675 = vld [vmem:[#allocation9 + $0x70] sm:$0xff]
      %v676 = vld [vmem:[#allocation9 + $0x78] sm:$0xff]
      %v677 = vld [vmem:[#allocation2] sm:$0xff]
      %v678 = vpack.c.bf16 %v677, %v677
      %v679 = vld [vmem:[#allocation11] sm:$0xff]
      %v680 = vld [vmem:[#allocation11 + $0x8] sm:$0xff]
      %v681 = vld [vmem:[#allocation11 + $0x10] sm:$0xff]
      %v682 = vld [vmem:[#allocation11 + $0x18] sm:$0xff]
      %v683 = vld [vmem:[#allocation11 + $0x20] sm:$0xff]
      %v684 = vld [vmem:[#allocation11 + $0x28] sm:$0xff]
      %v685 = vld [vmem:[#allocation11 + $0x30] sm:$0xff]
      %v686 = vld [vmem:[#allocation11 + $0x38] sm:$0xff]
      %v687 = vld [vmem:[#allocation11 + $0x40] sm:$0xff]
      %v688 = vld [vmem:[#allocation11 + $0x48] sm:$0xff]
      %v689 = vld [vmem:[#allocation11 + $0x50] sm:$0xff]
      %v690 = vld [vmem:[#allocation11 + $0x58] sm:$0xff]
      %v691 = vld [vmem:[#allocation11 + $0x60] sm:$0xff]
      %v692 = vld [vmem:[#allocation11 + $0x68] sm:$0xff]
      %v693 = vld [vmem:[#allocation11 + $0x70] sm:$0xff]
      %v694 = vld [vmem:[#allocation11 + $0x78] sm:$0xff]
      %v711 = vunpack.c.l.b16 %v679
      %v712 = vunpack.c.h.b16 %v679
      %v713 = vunpack.c.l.b16 %v680
      %v714 = vunpack.c.h.b16 %v680
      %v715 = vunpack.c.l.b16 %v681
      %v716 = vunpack.c.h.b16 %v681
      %v717 = vunpack.c.l.b16 %v682
      %v718 = vunpack.c.h.b16 %v682
      %v719 = vunpack.c.l.b16 %v683
      %v720 = vunpack.c.h.b16 %v683
      %v721 = vunpack.c.l.b16 %v684
      %v722 = vunpack.c.h.b16 %v684
      %v723 = vunpack.c.l.b16 %v685
      %v724 = vunpack.c.h.b16 %v685
      %v725 = vunpack.c.l.b16 %v686
      %v726 = vunpack.c.h.b16 %v686
      %v727 = vunpack.c.l.b16 %v687
      %v728 = vunpack.c.h.b16 %v687
      %v729 = vunpack.c.l.b16 %v688
      %v730 = vunpack.c.h.b16 %v688
      %v731 = vunpack.c.l.b16 %v689
      %v732 = vunpack.c.h.b16 %v689
      %v733 = vunpack.c.l.b16 %v690
      %v734 = vunpack.c.h.b16 %v690
      %v735 = vunpack.c.l.b16 %v691
      %v736 = vunpack.c.h.b16 %v691
      %v737 = vunpack.c.l.b16 %v692
      %v738 = vunpack.c.h.b16 %v692
      %v739 = vunpack.c.l.b16 %v693
      %v740 = vunpack.c.h.b16 %v693
      %v741 = vunpack.c.l.b16 %v694
      %v742 = vunpack.c.h.b16 %v694
      %v743 = vpack.c.b16 %v713, %v711
      %v744 = vpack.c.b16 %v714, %v712
      %v745 = vpack.c.b16 %v717, %v715
      %v746 = vpack.c.b16 %v718, %v716
      %v747 = vpack.c.b16 %v721, %v719
      %v748 = vpack.c.b16 %v722, %v720
      %v749 = vpack.c.b16 %v725, %v723
      %v750 = vpack.c.b16 %v726, %v724
      %v751 = vpack.c.b16 %v729, %v727
      %v752 = vpack.c.b16 %v730, %v728
      %v753 = vpack.c.b16 %v733, %v731
      %v754 = vpack.c.b16 %v734, %v732
      %v755 = vpack.c.b16 %v737, %v735
      %v756 = vpack.c.b16 %v738, %v736
      %v757 = vpack.c.b16 %v741, %v739
      %v758 = vpack.c.b16 %v742, %v740
      %775 = vmatpush.bf16.msra.mxu0 %v757
      %776 = vmatpush.bf16.msra.mxu0 %v755
      %777 = vmatpush.bf16.msra.mxu0 %v753
      %778 = vmatpush.bf16.msra.mxu0 %v751
      %779 = vmatpush.bf16.msra.mxu0 %v749
      %780 = vmatpush.bf16.msra.mxu0 %v747
      %781 = vmatpush.bf16.msra.mxu0 %v745
      %782 = vmatpush.bf16.msra.mxu0 %v743
      %783 = vmatmul.bf16.gmra.mxu0 %v678
      %v784 = vpop.f32.mrf.mxu0
      %v785 = vadd.f32 0.0, %v784
      %v786 = vpop.f32.mrf.mxu0
      %787 = vdwg.mxu0
      %788 = vmatpush.bf16.msra.mxu0 %v758
      %789 = vmatpush.bf16.msra.mxu0 %v756
      %790 = vmatpush.bf16.msra.mxu0 %v754
      %791 = vmatpush.bf16.msra.mxu0 %v752
      %792 = vmatpush.bf16.msra.mxu0 %v750
      %793 = vmatpush.bf16.msra.mxu0 %v748
      %794 = vmatpush.bf16.msra.mxu0 %v746
      %795 = vmatpush.bf16.msra.mxu0 %v744
      %796 = vmatmul.bf16.gmra.mxu0 %v678
      %v797 = vpop.f32.mrf.mxu0
      %v798 = vadd.f32 0.0, %v797
      %v799 = vpop.f32.mrf.mxu0
      %800 = vdwg.mxu0
      %v817 = vunpack.c.l.b16 %v661
      %v818 = vunpack.c.h.b16 %v661
      %v819 = vunpack.c.l.b16 %v662
      %v820 = vunpack.c.h.b16 %v662
      %v821 = vunpack.c.l.b16 %v663
      %v822 = vunpack.c.h.b16 %v663
      %v823 = vunpack.c.l.b16 %v664
      %v824 = vunpack.c.h.b16 %v664
      %v825 = vunpack.c.l.b16 %v665
      %v826 = vunpack.c.h.b16 %v665
      %v827 = vunpack.c.l.b16 %v666
      %v828 = vunpack.c.h.b16 %v666
      %v829 = vunpack.c.l.b16 %v667
      %v830 = vunpack.c.h.b16 %v667
      %v831 = vunpack.c.l.b16 %v668
      %v832 = vunpack.c.h.b16 %v668
      %v833 = vunpack.c.l.b16 %v669
      %v834 = vunpack.c.h.b16 %v669
      %v835 = vunpack.c.l.b16 %v670
      %v836 = vunpack.c.h.b16 %v670
      %v837 = vunpack.c.l.b16 %v671
      %v838 = vunpack.c.h.b16 %v671
      %v839 = vunpack.c.l.b16 %v672
      %v840 = vunpack.c.h.b16 %v672
      %v841 = vunpack.c.l.b16 %v673
      %v842 = vunpack.c.h.b16 %v673
      %v843 = vunpack.c.l.b16 %v674
      %v844 = vunpack.c.h.b16 %v674
      %v845 = vunpack.c.l.b16 %v675
      %v846 = vunpack.c.h.b16 %v675
      %v847 = vunpack.c.l.b16 %v676
      %v848 = vunpack.c.h.b16 %v676
      %v849 = vpack.c.b16 %v819, %v817
      %v850 = vpack.c.b16 %v820, %v818
      %v851 = vpack.c.b16 %v823, %v821
      %v852 = vpack.c.b16 %v824, %v822
      %v853 = vpack.c.b16 %v827, %v825
      %v854 = vpack.c.b16 %v828, %v826
      %v855 = vpack.c.b16 %v831, %v829
      %v856 = vpack.c.b16 %v832, %v830
      %v857 = vpack.c.b16 %v835, %v833
      %v858 = vpack.c.b16 %v836, %v834
      %v859 = vpack.c.b16 %v839, %v837
      %v860 = vpack.c.b16 %v840, %v838
      %v861 = vpack.c.b16 %v843, %v841
      %v862 = vpack.c.b16 %v844, %v842
      %v863 = vpack.c.b16 %v847, %v845
      %v864 = vpack.c.b16 %v848, %v846
      %881 = vmatpush.bf16.msra.mxu0 %v863
      %882 = vmatpush.bf16.msra.mxu0 %v861
      %883 = vmatpush.bf16.msra.mxu0 %v859
      %884 = vmatpush.bf16.msra.mxu0 %v857
      %885 = vmatpush.bf16.msra.mxu0 %v855
      %886 = vmatpush.bf16.msra.mxu0 %v853
      %887 = vmatpush.bf16.msra.mxu0 %v851
      %888 = vmatpush.bf16.msra.mxu0 %v849
      %889 = vmatmul.bf16.gmra.mxu0 %v660
      %v890 = vpop.f32.mrf.mxu0
      %v891 = vadd.f32 %v785, %v890
      %v892 = vpop.f32.mrf.mxu0
      %893 = vdwg.mxu0
      %894 = vmatpush.bf16.msra.mxu0 %v864
      %895 = vmatpush.bf16.msra.mxu0 %v862
      %896 = vmatpush.bf16.msra.mxu0 %v860
      %897 = vmatpush.bf16.msra.mxu0 %v858
      %898 = vmatpush.bf16.msra.mxu0 %v856
      %899 = vmatpush.bf16.msra.mxu0 %v854
      %900 = vmatpush.bf16.msra.mxu0 %v852
      %901 = vmatpush.bf16.msra.mxu0 %v850
      %902 = vmatmul.bf16.gmra.mxu0 %v660
      %v903 = vpop.f32.mrf.mxu0
      %v904 = vadd.f32 %v798, %v903
      %v905 = vpop.f32.mrf.mxu0
      %906 = vdwg.mxu0
      %v907 = vld [vmem:[%s8] sm:$0x3]
      %v909 = vperm.slane %v907, 0
      %v910 = vperm.slane %v907, 1
      %v913 = vadd.f32 %v891, %v909
      %v914 = vadd.f32 %v904, %v910
      %v915 = vpack.c.bf16 %v913, %v913
      %v916 = vpack.c.bf16 %v914, %v914
      %v917 = vld [vmem:[#allocation12] sm:$0xf]
      %v918 = vld [vmem:[#allocation12 + $0x4] sm:$0xf]
      %v919 = vld [vmem:[#allocation12 + $0x8] sm:$0xf]
      %v920 = vld [vmem:[#allocation12 + $0xc] sm:$0xf]
      %v921 = vld [vmem:[#allocation12 + $0x10] sm:$0xf]
      %v922 = vld [vmem:[#allocation12 + $0x14] sm:$0xf]
      %v923 = vld [vmem:[#allocation12 + $0x18] sm:$0xf]
      %v924 = vld [vmem:[#allocation12 + $0x1c] sm:$0xf]
      %v925 = vld [vmem:[#allocation12 + $0x20] sm:$0xf]
      %v926 = vld [vmem:[#allocation12 + $0x24] sm:$0xf]
      %v927 = vld [vmem:[#allocation12 + $0x28] sm:$0xf]
      %v928 = vld [vmem:[#allocation12 + $0x2c] sm:$0xf]
      %v929 = vld [vmem:[#allocation12 + $0x30] sm:$0xf]
      %v930 = vld [vmem:[#allocation12 + $0x34] sm:$0xf]
      %v931 = vld [vmem:[#allocation12 + $0x38] sm:$0xf]
      %v932 = vld [vmem:[#allocation12 + $0x3c] sm:$0xf]
      %v933 = vld [vmem:[#allocation12 + $0x40] sm:$0xf]
      %v934 = vld [vmem:[#allocation12 + $0x44] sm:$0xf]
      %v935 = vld [vmem:[#allocation12 + $0x48] sm:$0xf]
      %v936 = vld [vmem:[#allocation12 + $0x4c] sm:$0xf]
      %v937 = vld [vmem:[#allocation12 + $0x50] sm:$0xf]
      %v938 = vld [vmem:[#allocation12 + $0x54] sm:$0xf]
      %v939 = vld [vmem:[#allocation12 + $0x58] sm:$0xf]
      %v940 = vld [vmem:[#allocation12 + $0x5c] sm:$0xf]
      %v941 = vld [vmem:[#allocation12 + $0x60] sm:$0xf]
      %v942 = vld [vmem:[#allocation12 + $0x64] sm:$0xf]
      %v943 = vld [vmem:[#allocation12 + $0x68] sm:$0xf]
      %v944 = vld [vmem:[#allocation12 + $0x6c] sm:$0xf]
      %v945 = vld [vmem:[#allocation12 + $0x70] sm:$0xf]
      %v946 = vld [vmem:[#allocation12 + $0x74] sm:$0xf]
      %v947 = vld [vmem:[#allocation12 + $0x78] sm:$0xf]
      %v948 = vld [vmem:[#allocation12 + $0x7c] sm:$0xf]
      %v949 = vld [vmem:[%s10] sm:$0x1]
      %v951 = vperm.slane %v949, 0
      %v985 = vunpack.c.l.b16 %v917
      %v986 = vunpack.c.l.b16 %v918
      %v987 = vunpack.c.l.b16 %v919
      %v988 = vunpack.c.l.b16 %v920
      %v989 = vunpack.c.l.b16 %v921
      %v990 = vunpack.c.l.b16 %v922
      %v991 = vunpack.c.l.b16 %v923
      %v992 = vunpack.c.l.b16 %v924
      %v993 = vunpack.c.l.b16 %v925
      %v994 = vunpack.c.l.b16 %v926
      %v995 = vunpack.c.l.b16 %v927
      %v996 = vunpack.c.l.b16 %v928
      %v997 = vunpack.c.l.b16 %v929
      %v998 = vunpack.c.l.b16 %v930
      %v999 = vunpack.c.l.b16 %v931
      %v1000 = vunpack.c.l.b16 %v932
      %v1001 = vunpack.c.l.b16 %v933
      %v1002 = vunpack.c.l.b16 %v934
      %v1003 = vunpack.c.l.b16 %v935
      %v1004 = vunpack.c.l.b16 %v936
      %v1005 = vunpack.c.l.b16 %v937
      %v1006 = vunpack.c.l.b16 %v938
      %v1007 = vunpack.c.l.b16 %v939
      %v1008 = vunpack.c.l.b16 %v940
      %v1009 = vunpack.c.l.b16 %v941
      %v1010 = vunpack.c.l.b16 %v942
      %v1011 = vunpack.c.l.b16 %v943
      %v1012 = vunpack.c.l.b16 %v944
      %v1013 = vunpack.c.l.b16 %v945
      %v1014 = vunpack.c.l.b16 %v946
      %v1015 = vunpack.c.l.b16 %v947
      %v1016 = vunpack.c.l.b16 %v948
      %v1017 = vpack.c.b16 %v986, %v985
      %v1018 = vpack.c.b16 %v988, %v987
      %v1019 = vpack.c.b16 %v990, %v989
      %v1020 = vpack.c.b16 %v992, %v991
      %v1021 = vpack.c.b16 %v994, %v993
      %v1022 = vpack.c.b16 %v996, %v995
      %v1023 = vpack.c.b16 %v998, %v997
      %v1024 = vpack.c.b16 %v1000, %v999
      %v1025 = vpack.c.b16 %v1002, %v1001
      %v1026 = vpack.c.b16 %v1004, %v1003
      %v1027 = vpack.c.b16 %v1006, %v1005
      %v1028 = vpack.c.b16 %v1008, %v1007
      %v1029 = vpack.c.b16 %v1010, %v1009
      %v1030 = vpack.c.b16 %v1012, %v1011
      %v1031 = vpack.c.b16 %v1014, %v1013
      %v1032 = vpack.c.b16 %v1016, %v1015
      %1049 = vmatpush.bf16.msra.mxu0 %v1024
      %1050 = vmatpush.bf16.msra.mxu0 %v1023
      %1051 = vmatpush.bf16.msra.mxu0 %v1022
      %1052 = vmatpush.bf16.msra.mxu0 %v1021
      %1053 = vmatpush.bf16.msra.mxu0 %v1020
      %1054 = vmatpush.bf16.msra.mxu0 %v1019
      %1055 = vmatpush.bf16.msra.mxu0 %v1018
      %1056 = vmatpush.bf16.msra.mxu0 %v1017
      %1057 = vmatmul.bf16.gmra.mxu0 %v915
      %v1058 = vpop.f32.mrf.mxu0
      %v1059 = vadd.f32 %v951, %v1058
      %v1060 = vpop.f32.mrf.mxu0
      %1061 = vdwg.mxu0
      %1062 = vmatpush.bf16.msra.mxu0 %v1032
      %1063 = vmatpush.bf16.msra.mxu0 %v1031
      %1064 = vmatpush.bf16.msra.mxu0 %v1030
      %1065 = vmatpush.bf16.msra.mxu0 %v1029
      %1066 = vmatpush.bf16.msra.mxu0 %v1028
      %1067 = vmatpush.bf16.msra.mxu0 %v1027
      %1068 = vmatpush.bf16.msra.mxu0 %v1026
      %1069 = vmatpush.bf16.msra.mxu0 %v1025
      %1070 = vmatmul.bf16.gmra.mxu0 %v916
      %v1071 = vpop.f32.mrf.mxu0
      %v1072 = vadd.f32 %v1059, %v1071
      %v1073 = vpop.f32.mrf.mxu0
      %1074 = vdwg.mxu0
      %1075 = vst [vmem:[#allocation14] sm:$0xff] %v1072
    $region73: #{tpu_custom_call.1} parent=1 // pred_fallthru
      _
    // Predicated region
    $region74: #{tpu_custom_call.1} parent=1 // pred_check
      _
    $region75: #{tpu_custom_call.1} parent=1 // pred_check_branch
      %1077 = sbr.rel (0) target = $region77
    $region76: #{tpu_custom_call.1} parent=1 // pred_region
      %1079 = vsyncadd [#allocation8], 0
      %s1081 = sshll.u32 [#allocation14], 4
      %s1082 = int_to_ptr.vmem [resolvable:$true] %s1081
      %s1083 = sshll.u32 %s11, 4
      %s1084 = int_to_ptr.hbm [resolvable:$true] %s1083
      %1086 = dma.vmem_to_hbm [thread:$0]  %s1082, 128, %s1084, [#allocation8]
    $region77: #{tpu_custom_call.1} parent=1 // pred_fallthru
      _
    // Predicated region
    $region78: #{tpu_custom_call.1} parent=1 // pred_check
      _
    $region79: #{tpu_custom_call.1} parent=1 // pred_check_branch
      %1088 = sbr.rel (0) target = $region81
    $region80: #{tpu_custom_call.1} parent=1 // pred_region
      %1090 = dma.done [#allocation8], 128
    $region81: #{tpu_custom_call.1} parent=1 // pred_fallthru
      _
    %1091 = vsyncpa [#allocation7], 1
    %1092 = vsyncpa [#allocation10], 1
    %1093 = vsyncpa [#allocation13], 1
    %1094 = vsyncpa [#allocation8], 1

</llo_original>
